<compile_context>
chip_gen: v5e
topology: v5e:2x2
jax: 0.10.0
libtpu: 0.0.40
codegen_flags: <defaults>
</compile_context>

<pallas_src>
import jax
import jax.numpy as jnp
from jax.experimental import pallas as pl
from jax.experimental.pallas import tpu as pltpu

# ----------------------------- static geometry --------------------------------
L0 = 16                      # input length (stem / layer1 input)
L3 = 2                       # length after three stride-2 blocks
C_IN = 1
C0, C1, C2, C3 = 32, 64, 128, 256


def _rup(n, m):
    return ((n + m - 1) // m) * m


# ----------------------------- in-kernel helpers --------------------------------

def _mm(lhs3, w2d, cout):
    """(l, B, cin) x (cin, cout) -> (l, B, cout); bf16 MXU matmul, f32 accumulate."""
    l, bsz, cin = lhs3.shape
    lhs = lhs3.reshape(l * bsz, cin).astype(jnp.bfloat16)     # B multiple of 8 -> free
    out = jnp.dot(lhs, w2d, preferred_element_type=jnp.float32)
    return out.reshape(l, bsz, cout)


def _residual_block(x, w_ref, b_ref, cin, cout):
    """conv1(k3,s2,p1)+BN+ReLU -> conv2(k3,s1,p1)+BN; 1x1(s2)+BN shortcut; add; ReLU.

    x: (l_in, B, cin) f32.  w_ref rows: [W1_0;W1_1;W1_2 | W2_0;W2_1;W2_2 | Wd] (bf16).
    b_ref rows: [bn1 shift, bn2 shift + shortcut-bn shift] (f32).
    Returns (l_in//2, B, cout) f32.
    """
    l_in, bsz, _ = x.shape
    l_out = l_in // 2

    zin = jnp.zeros((1, bsz, cin), jnp.float32)
    xp = jnp.concatenate([zin, x, zin], axis=0)               # (l_in+2, B, cin)
    # even/odd view of the padded length axis: xe[t] = xp[2t], xo[t] = xp[2t+1]
    xpr = xp.reshape(l_out + 1, 2, bsz, cin)                  # leading-dim reshape: free
    xe = xpr[:, 0]
    xo = xpr[:, 1]
    g = (xe[:l_out], xo[:l_out], xe[1:l_out + 1])             # g[k][t] = xp[2t+k]

    w1 = [w_ref[k * cin:(k + 1) * cin, :] for k in range(3)]
    o2 = 3 * cin
    w2 = [w_ref[o2 + k * cout:o2 + (k + 1) * cout, :] for k in range(3)]
    wd = w_ref[o2 + 3 * cout:o2 + 3 * cout + cin, :]

    # conv1 (stride 2) + folded BN1 + ReLU
    acc1 = _mm(g[0], w1[0], cout) + _mm(g[1], w1[1], cout) + _mm(g[2], w1[2], cout)
    b1 = b_ref[0:1, :].reshape(1, 1, cout)
    h1 = jnp.maximum(acc1 + b1, 0.0)                          # (l_out, B, cout)

    # 1x1 stride-2 downsample shortcut: x[2t] == xp[2t+1] == g[1]
    idn = _mm(g[1], wd, cout)

    # conv2 (stride 1) + folded BN2, residual add, ReLU
    zout = jnp.zeros((1, bsz, cout), jnp.float32)
    h1p = jnp.concatenate([zout, h1, zout], axis=0)           # (l_out+2, B, cout)
    acc2 = (_mm(h1p[0:l_out], w2[0], cout)
            + _mm(h1p[1:l_out + 1], w2[1], cout)
            + _mm(h1p[2:l_out + 2], w2[2], cout))
    b2d = b_ref[1:2, :].reshape(1, 1, cout)                   # bn2 shift + shortcut shift
    return jnp.maximum(acc2 + idn + b2d, 0.0)


# ----------------------------- the fused kernel ----------------------------------

def _resnet1d_kernel(x_ref, sw_ref, sb_ref,
                     w1_ref, b1_ref, w2_ref, b2_ref, w3_ref, b3_ref,
                     fw_ref, fb_ref, o_ref):
    bsz = x_ref.shape[1]

    # ---- stem: Conv1d(1, 32, k=3, s=1, p=1) + BN + ReLU.  Cin=1 -> VPU broadcasts ----
    xp = x_ref[...]                                           # (L0+2, B, 1), pre-padded
    acc = jnp.zeros((L0, bsz, C0), jnp.float32)
    for k in range(3):
        wk = sw_ref[k:k + 1, :].reshape(1, 1, C0)
        acc = acc + xp[k:k + L0] * wk
    h = jnp.maximum(acc + sb_ref[0:1, :].reshape(1, 1, C0), 0.0)     # (16, B, 32)

    # ---- residual blocks: 32->64 (16->8), 64->128 (8->4), 128->256 (4->2) ----
    h = _residual_block(h, w1_ref, b1_ref, C0, C1)
    h = _residual_block(h, w2_ref, b2_ref, C1, C2)
    h = _residual_block(h, w3_ref, b3_ref, C2, C3)            # (2, B, 256)

    # ---- head: AdaptiveAvgPool1d(1) + Linear(256, P); (B,256)x(256,P) on the MXU ----
    pooled = jnp.sum(h, axis=0) * (1.0 / h.shape[0])          # (B, 256)
    logits = jnp.dot(pooled.astype(jnp.bfloat16), fw_ref[...],
                     preferred_element_type=jnp.float32) + fb_ref[...]
    o_ref[...] = logits                                       # (B, num_out)


# ----------------------------- wrapper ------------------------------------------

def resnet1d_forward(x_ncl, kp, b_tile=128):
    """x_ncl: (N, 1, 16) f32, PyTorch NCL layout. kp: see prepare_kernel_params."""
    n = x_ncl.shape[0]
    assert x_ncl.ndim == 3 and x_ncl.shape[1] == C_IN and x_ncl.shape[2] == L0
    num_out = kp["fc_w"].shape[1]

    # B_TILE: >=128 fills the 256-wide MXU M dim at layer3; clamp (to a multiple of
    # 8 for sublane alignment) for small batches.  For N > B_TILE there are >=2 grid
    # steps so v7x megacore gets work on both TensorCores.
    bt = min(b_tile, _rup(n, 8))
    n_pad = _rup(n, bt)

    # (N,1,16) -> zero-pad batch & length (conv pad=1) and put batch on sublanes:
    # (L0+2, N_pad, 1).  One tiny host transpose; everything else stays in-kernel.
    x = x_ncl.reshape(n, L0)
    x = jnp.pad(x, ((0, n_pad - n), (1, 1)))
    x = jnp.transpose(x)[:, :, None].astype(jnp.float32)      # (18, n_pad, 1)

    weights = [kp["stem_w"], kp["stem_b"],
               kp["l1_w"], kp["l1_b"], kp["l2_w"], kp["l2_b"],
               kp["l3_w"], kp["l3_b"], kp["fc_w"], kp["fc_b"]]

    def const_spec(a):
        return pl.BlockSpec(a.shape, lambda i, _nd=a.ndim: (0,) * _nd)

    out = pl.pallas_call(
        _resnet1d_kernel,
        out_shape=jax.ShapeDtypeStruct((n_pad, num_out), jnp.float32),
        grid_spec=pltpu.PrefetchScalarGridSpec(
            num_scalar_prefetch=0,
            grid=(n_pad // bt,),
            in_specs=[pl.BlockSpec((L0 + 2, bt, 1), lambda i: (0, i, 0))]
                     + [const_spec(a) for a in weights],
            out_specs=pl.BlockSpec((bt, num_out), lambda i: (i, 0))),
        compiler_params=pltpu.CompilerParams(
            dimension_semantics=("parallel",)),
    )(x, *weights)
    return out[:n]


# ----------------------------- parameters ----------------------------------------

def init_model_params(key, num_params=2):
    """Raw params in PyTorch layout: Conv1d weight (Cout, Cin, K), bias=True; BN stats."""
    keys = iter(jax.random.split(key, 64))

    def conv_init(cout, cin, k):
        bound = 1.0 / float(cin * k) ** 0.5
        w = jax.random.uniform(next(keys), (cout, cin, k), jnp.float32, -bound, bound)
        b = jax.random.uniform(next(keys), (cout,), jnp.float32, -bound, bound)
        return w, b

    def bn_init(c):
        return dict(
            gamma=jax.random.uniform(next(keys), (c,), jnp.float32, 0.5, 1.5),
            beta=0.1 * jax.random.normal(next(keys), (c,), jnp.float32),
            rmean=0.1 * jax.random.normal(next(keys), (c,), jnp.float32),
            rvar=jax.random.uniform(next(keys), (c,), jnp.float32, 0.5, 1.5))

    def block(cin, cout):
        w1, cb1 = conv_init(cout, cin, 3)
        w2, cb2 = conv_init(cout, cout, 3)
        wd, cbd = conv_init(cout, cin, 1)
        return dict(w1=w1, cb1=cb1, bn1=bn_init(cout),
                    w2=w2, cb2=cb2, bn2=bn_init(cout),
                    wd=wd, cbd=cbd, bnd=bn_init(cout))

    ws, cbs = conv_init(C0, C_IN, 3)
    params = dict(stem=dict(w=ws, cb=cbs, bn=bn_init(C0)),
                  layer1=block(C0, C1), layer2=block(C1, C2), layer3=block(C2, C3))
    bound = 1.0 / C3 ** 0.5
    params["fc_w"] = jax.random.uniform(next(keys), (C3, num_params), jnp.float32,
                                        -bound, bound)
    params["fc_b"] = jax.random.uniform(next(keys), (num_params,), jnp.float32,
                                        -bound, bound)
    return params


def prepare_kernel_params(params, eps=1e-5):
    """Fold eval-mode BN (and conv bias) into weights/biases; pack per-layer slabs."""
    def fold(w, cb, bn):
        scale = bn["gamma"] / jnp.sqrt(bn["rvar"] + eps)                  # (Cout,)
        w_f = jnp.transpose(w, (2, 1, 0)) * scale[None, None, :]          # (K, Cin, Cout)
        shift = bn["beta"] - bn["rmean"] * scale + cb * scale             # (Cout,)
        return w_f, shift

    kp = {}
    sw, sb = fold(params["stem"]["w"], params["stem"]["cb"], params["stem"]["bn"])
    kp["stem_w"] = sw.reshape(3, C0).astype(jnp.float32)      # stem stays f32 (VPU path)
    kp["stem_b"] = sb[None, :].astype(jnp.float32)

    for name, lyr, cin, cout in (("l1", "layer1", C0, C1),
                                 ("l2", "layer2", C1, C2),
                                 ("l3", "layer3", C2, C3)):
        p = params[lyr]
        w1, t1 = fold(p["w1"], p["cb1"], p["bn1"])            # (3, cin, cout)
        w2, t2 = fold(p["w2"], p["cb2"], p["bn2"])            # (3, cout, cout)
        wd, td = fold(p["wd"], p["cbd"], p["bnd"])            # (1, cin, cout)
        slab = jnp.concatenate([w1.reshape(3 * cin, cout),
                                w2.reshape(3 * cout, cout),
                                wd.reshape(cin, cout)], axis=0)
        kp[name + "_w"] = slab.astype(jnp.bfloat16)           # (4*cin+3*cout, cout)
        kp[name + "_b"] = jnp.stack([t1, t2 + td], axis=0).astype(jnp.float32)

    kp["fc_w"] = params["fc_w"].astype(jnp.bfloat16)          # (256, P)
    kp["fc_b"] = params["fc_b"][None, :].astype(jnp.float32)  # (1, P)
    return kp


# ----------------------------- main -----------------------------------------------

if __name__ == "__main__":
    key = jax.random.PRNGKey(0)
    k_params, k_x = jax.random.split(key)
    raw_params = init_model_params(k_params, num_params=2)
    kparams = prepare_kernel_params(raw_params)

    # input matching nn.Conv1d(1, 32, ...): (batch=2, channels=1, length=16)
    x = jax.random.normal(k_x, (2, 1, 16), jnp.float32)

    fwd = jax.jit(resnet1d_forward)
    out = jax.block_until_ready(fwd(x, kparams))
    assert out.shape == (2, 2) and out.dtype == jnp.float32
    assert bool(jnp.all(jnp.isfinite(out)))
    print("KERNEL_OK")
</pallas_src>

<mosaic_0001>
module attributes {stable_mosaic.version = 11 : i64} {
  func.func @_resnet1d_kernel(%arg0: i32, %arg1: memref<18x8x1xf32, #tpu.memory_space<vmem>>, %arg2: memref<3x32xf32, #tpu.memory_space<vmem>>, %arg3: memref<1x32xf32, #tpu.memory_space<vmem>>, %arg4: memref<320x64xbf16, #tpu.memory_space<vmem>>, %arg5: memref<2x64xf32, #tpu.memory_space<vmem>>, %arg6: memref<640x128xbf16, #tpu.memory_space<vmem>>, %arg7: memref<2x128xf32, #tpu.memory_space<vmem>>, %arg8: memref<1280x256xbf16, #tpu.memory_space<vmem>>, %arg9: memref<2x256xf32, #tpu.memory_space<vmem>>, %arg10: memref<256x2xbf16, #tpu.memory_space<vmem>>, %arg11: memref<1x2xf32, #tpu.memory_space<vmem>>, %arg12: memref<8x2xf32, #tpu.memory_space<vmem>>) attributes {dimension_semantics = [#tpu.dimension_semantics<parallel>], iteration_bounds = array<i64: 1>, scalar_prefetch = 0 : i64, scratch_operands = 0 : i64, tpu.core_type = #tpu.core_type<tc>, window_params = [{transform_indices = @transform_0, window_bounds = array<i64: 18, 8, 1>}, {pipeline_mode = #tpu.pipeline_mode<synchronous>, transform_indices = @transform_1, window_bounds = array<i64: 3, 32>}, {pipeline_mode = #tpu.pipeline_mode<synchronous>, transform_indices = @transform_2, window_bounds = array<i64: 1, 32>}, {pipeline_mode = #tpu.pipeline_mode<synchronous>, transform_indices = @transform_3, window_bounds = array<i64: 320, 64>}, {pipeline_mode = #tpu.pipeline_mode<synchronous>, transform_indices = @transform_4, window_bounds = array<i64: 2, 64>}, {pipeline_mode = #tpu.pipeline_mode<synchronous>, transform_indices = @transform_5, window_bounds = array<i64: 640, 128>}, {pipeline_mode = #tpu.pipeline_mode<synchronous>, transform_indices = @transform_6, window_bounds = array<i64: 2, 128>}, {pipeline_mode = #tpu.pipeline_mode<synchronous>, transform_indices = @transform_7, window_bounds = array<i64: 1280, 256>}, {pipeline_mode = #tpu.pipeline_mode<synchronous>, transform_indices = @transform_8, window_bounds = array<i64: 2, 256>}, {pipeline_mode = #tpu.pipeline_mode<synchronous>, transform_indices = @transform_9, window_bounds = array<i64: 256, 2>}, {pipeline_mode = #tpu.pipeline_mode<synchronous>, transform_indices = @transform_10, window_bounds = array<i64: 1, 2>}, {transform_indices = @transform_11, window_bounds = array<i64: 8, 2>}]} {
    %c0 = arith.constant 0 : index
    %c0_0 = arith.constant 0 : index
    %c0_1 = arith.constant 0 : index
    %0 = vector.load %arg1[%c0, %c0_0, %c0_1] : memref<18x8x1xf32, #tpu.memory_space<vmem>>, vector<18x8x1xf32>
    %cst = arith.constant 0.000000e+00 : f32
    %1 = vector.broadcast %cst : f32 to vector<16x8x32xf32>
    %c0_2 = arith.constant 0 : index
    %c0_3 = arith.constant 0 : index
    %2 = vector.load %arg2[%c0_2, %c0_3] : memref<3x32xf32, #tpu.memory_space<vmem>>, vector<1x32xf32>
    %3 = vector.shape_cast %2 : vector<1x32xf32> to vector<1x1x32xf32>
    %4 = vector.extract_strided_slice %0 {offsets = [0, 0, 0], sizes = [16, 8, 1], strides = [1, 1, 1]} : vector<18x8x1xf32> to vector<16x8x1xf32>
    %5 = vector.broadcast %4 : vector<16x8x1xf32> to vector<16x8x32xf32>
    %6 = vector.broadcast %3 : vector<1x1x32xf32> to vector<16x8x32xf32>
    %7 = arith.mulf %5, %6 : vector<16x8x32xf32>
    %8 = arith.addf %1, %7 : vector<16x8x32xf32>
    %c1 = arith.constant 1 : index
    %c0_4 = arith.constant 0 : index
    %9 = vector.load %arg2[%c1, %c0_4] : memref<3x32xf32, #tpu.memory_space<vmem>>, vector<1x32xf32>
    %10 = vector.shape_cast %9 : vector<1x32xf32> to vector<1x1x32xf32>
    %11 = vector.extract_strided_slice %0 {offsets = [1, 0, 0], sizes = [16, 8, 1], strides = [1, 1, 1]} : vector<18x8x1xf32> to vector<16x8x1xf32>
    %12 = vector.broadcast %11 : vector<16x8x1xf32> to vector<16x8x32xf32>
    %13 = vector.broadcast %10 : vector<1x1x32xf32> to vector<16x8x32xf32>
    %14 = arith.mulf %12, %13 : vector<16x8x32xf32>
    %15 = arith.addf %8, %14 : vector<16x8x32xf32>
    %c2 = arith.constant 2 : index
    %c0_5 = arith.constant 0 : index
    %16 = vector.load %arg2[%c2, %c0_5] : memref<3x32xf32, #tpu.memory_space<vmem>>, vector<1x32xf32>
    %17 = vector.shape_cast %16 : vector<1x32xf32> to vector<1x1x32xf32>
    %18 = vector.extract_strided_slice %0 {offsets = [2, 0, 0], sizes = [16, 8, 1], strides = [1, 1, 1]} : vector<18x8x1xf32> to vector<16x8x1xf32>
    %19 = vector.broadcast %18 : vector<16x8x1xf32> to vector<16x8x32xf32>
    %20 = vector.broadcast %17 : vector<1x1x32xf32> to vector<16x8x32xf32>
    %21 = arith.mulf %19, %20 : vector<16x8x32xf32>
    %22 = arith.addf %15, %21 : vector<16x8x32xf32>
    %c0_6 = arith.constant 0 : index
    %c0_7 = arith.constant 0 : index
    %23 = vector.load %arg3[%c0_6, %c0_7] : memref<1x32xf32, #tpu.memory_space<vmem>>, vector<1x32xf32>
    %24 = vector.shape_cast %23 : vector<1x32xf32> to vector<1x1x32xf32>
    %25 = vector.broadcast %24 : vector<1x1x32xf32> to vector<16x8x32xf32>
    %26 = arith.addf %22, %25 : vector<16x8x32xf32>
    %cst_8 = arith.constant 0.000000e+00 : f32
    %27 = vector.broadcast %cst_8 : f32 to vector<16x8x32xf32>
    %28 = arith.maximumf %26, %27 : vector<16x8x32xf32>
    %cst_9 = arith.constant 0.000000e+00 : f32
    %29 = vector.broadcast %cst_9 : f32 to vector<1x8x32xf32>
    %30 = tpu.concatenate %29, %28, %29 in 0 : vector<1x8x32xf32>, vector<16x8x32xf32>, vector<1x8x32xf32> -> vector<18x8x32xf32>
    %31 = vector.shape_cast %30 : vector<18x8x32xf32> to vector<9x2x8x32xf32>
    %32 = vector.extract_strided_slice %31 {offsets = [0, 0, 0, 0], sizes = [9, 1, 8, 32], strides = [1, 1, 1, 1]} : vector<9x2x8x32xf32> to vector<9x1x8x32xf32>
    %33 = vector.shape_cast %32 : vector<9x1x8x32xf32> to vector<9x8x32xf32>
    %34 = vector.extract_strided_slice %31 {offsets = [0, 1, 0, 0], sizes = [9, 1, 8, 32], strides = [1, 1, 1, 1]} : vector<9x2x8x32xf32> to vector<9x1x8x32xf32>
    %35 = vector.shape_cast %34 : vector<9x1x8x32xf32> to vector<9x8x32xf32>
    %36 = vector.extract_strided_slice %33 {offsets = [0, 0, 0], sizes = [8, 8, 32], strides = [1, 1, 1]} : vector<9x8x32xf32> to vector<8x8x32xf32>
    %37 = vector.extract_strided_slice %35 {offsets = [0, 0, 0], sizes = [8, 8, 32], strides = [1, 1, 1]} : vector<9x8x32xf32> to vector<8x8x32xf32>
    %38 = vector.extract_strided_slice %33 {offsets = [1, 0, 0], sizes = [8, 8, 32], strides = [1, 1, 1]} : vector<9x8x32xf32> to vector<8x8x32xf32>
    %c0_10 = arith.constant 0 : index
    %c0_11 = arith.constant 0 : index
    %39 = vector.load %arg4[%c0_10, %c0_11] : memref<320x64xbf16, #tpu.memory_space<vmem>>, vector<32x64xbf16>
    %c32 = arith.constant 32 : index
    %c0_12 = arith.constant 0 : index
    %40 = vector.load %arg4[%c32, %c0_12] : memref<320x64xbf16, #tpu.memory_space<vmem>>, vector<32x64xbf16>
    %c64 = arith.constant 64 : index
    %c0_13 = arith.constant 0 : index
    %41 = vector.load %arg4[%c64, %c0_13] : memref<320x64xbf16, #tpu.memory_space<vmem>>, vector<32x64xbf16>
    %c96 = arith.constant 96 : index
    %c0_14 = arith.constant 0 : index
    %42 = vector.load %arg4[%c96, %c0_14] : memref<320x64xbf16, #tpu.memory_space<vmem>>, vector<64x64xbf16>
    %c160 = arith.constant 160 : index
    %c0_15 = arith.constant 0 : index
    %43 = vector.load %arg4[%c160, %c0_15] : memref<320x64xbf16, #tpu.memory_space<vmem>>, vector<64x64xbf16>
    %c224 = arith.constant 224 : index
    %c0_16 = arith.constant 0 : index
    %44 = vector.load %arg4[%c224, %c0_16] : memref<320x64xbf16, #tpu.memory_space<vmem>>, vector<64x64xbf16>
    %c288 = arith.constant 288 : index
    %c0_17 = arith.constant 0 : index
    %45 = vector.load %arg4[%c288, %c0_17] : memref<320x64xbf16, #tpu.memory_space<vmem>>, vector<32x64xbf16>
    %46 = vector.shape_cast %36 : vector<8x8x32xf32> to vector<64x32xf32>
    %47 = arith.truncf %46 : vector<64x32xf32> to vector<64x32xbf16>
    %cst_18 = arith.constant dense<0.000000e+00> : vector<64x64xf32>
    %48 = tpu.matmul %47, %39, %cst_18 {dimension_numbers = #tpu.dot_dimension_numbers<[1], [0], [0], [1], [0, 0, 1, 1], [], []>} : vector<64x32xbf16>, vector<32x64xbf16>, vector<64x64xf32> -> vector<64x64xf32>
    %49 = vector.shape_cast %48 : vector<64x64xf32> to vector<8x8x64xf32>
    %50 = vector.shape_cast %37 : vector<8x8x32xf32> to vector<64x32xf32>
    %51 = arith.truncf %50 : vector<64x32xf32> to vector<64x32xbf16>
    %cst_19 = arith.constant dense<0.000000e+00> : vector<64x64xf32>
    %52 = tpu.matmul %51, %40, %cst_19 {dimension_numbers = #tpu.dot_dimension_numbers<[1], [0], [0], [1], [0, 0, 1, 1], [], []>} : vector<64x32xbf16>, vector<32x64xbf16>, vector<64x64xf32> -> vector<64x64xf32>
    %53 = vector.shape_cast %52 : vector<64x64xf32> to vector<8x8x64xf32>
    %54 = arith.addf %49, %53 : vector<8x8x64xf32>
    %55 = vector.shape_cast %38 : vector<8x8x32xf32> to vector<64x32xf32>
    %56 = arith.truncf %55 : vector<64x32xf32> to vector<64x32xbf16>
    %cst_20 = arith.constant dense<0.000000e+00> : vector<64x64xf32>
    %57 = tpu.matmul %56, %41, %cst_20 {dimension_numbers = #tpu.dot_dimension_numbers<[1], [0], [0], [1], [0, 0, 1, 1], [], []>} : vector<64x32xbf16>, vector<32x64xbf16>, vector<64x64xf32> -> vector<64x64xf32>
    %58 = vector.shape_cast %57 : vector<64x64xf32> to vector<8x8x64xf32>
    %59 = arith.addf %54, %58 : vector<8x8x64xf32>
    %c0_21 = arith.constant 0 : index
    %c0_22 = arith.constant 0 : index
    %60 = vector.load %arg5[%c0_21, %c0_22] : memref<2x64xf32, #tpu.memory_space<vmem>>, vector<1x64xf32>
    %61 = vector.shape_cast %60 : vector<1x64xf32> to vector<1x1x64xf32>
    %62 = vector.broadcast %61 : vector<1x1x64xf32> to vector<8x8x64xf32>
    %63 = arith.addf %59, %62 : vector<8x8x64xf32>
    %cst_23 = arith.constant 0.000000e+00 : f32
    %64 = vector.broadcast %cst_23 : f32 to vector<8x8x64xf32>
    %65 = arith.maximumf %63, %64 : vector<8x8x64xf32>
    %66 = vector.shape_cast %37 : vector<8x8x32xf32> to vector<64x32xf32>
    %67 = arith.truncf %66 : vector<64x32xf32> to vector<64x32xbf16>
    %cst_24 = arith.constant dense<0.000000e+00> : vector<64x64xf32>
    %68 = tpu.matmul %67, %45, %cst_24 {dimension_numbers = #tpu.dot_dimension_numbers<[1], [0], [0], [1], [0, 0, 1, 1], [], []>} : vector<64x32xbf16>, vector<32x64xbf16>, vector<64x64xf32> -> vector<64x64xf32>
    %69 = vector.shape_cast %68 : vector<64x64xf32> to vector<8x8x64xf32>
    %cst_25 = arith.constant 0.000000e+00 : f32
    %70 = vector.broadcast %cst_25 : f32 to vector<1x8x64xf32>
    %71 = tpu.concatenate %70, %65, %70 in 0 : vector<1x8x64xf32>, vector<8x8x64xf32>, vector<1x8x64xf32> -> vector<10x8x64xf32>
    %72 = vector.extract_strided_slice %71 {offsets = [0, 0, 0], sizes = [8, 8, 64], strides = [1, 1, 1]} : vector<10x8x64xf32> to vector<8x8x64xf32>
    %73 = vector.shape_cast %72 : vector<8x8x64xf32> to vector<64x64xf32>
    %74 = arith.truncf %73 : vector<64x64xf32> to vector<64x64xbf16>
    %cst_26 = arith.constant dense<0.000000e+00> : vector<64x64xf32>
    %75 = tpu.matmul %74, %42, %cst_26 {dimension_numbers = #tpu.dot_dimension_numbers<[1], [0], [0], [1], [0, 0, 1, 1], [], []>} : vector<64x64xbf16>, vector<64x64xbf16>, vector<64x64xf32> -> vector<64x64xf32>
    %76 = vector.shape_cast %75 : vector<64x64xf32> to vector<8x8x64xf32>
    %77 = vector.extract_strided_slice %71 {offsets = [1, 0, 0], sizes = [8, 8, 64], strides = [1, 1, 1]} : vector<10x8x64xf32> to vector<8x8x64xf32>
    %78 = vector.shape_cast %77 : vector<8x8x64xf32> to vector<64x64xf32>
    %79 = arith.truncf %78 : vector<64x64xf32> to vector<64x64xbf16>
    %cst_27 = arith.constant dense<0.000000e+00> : vector<64x64xf32>
    %80 = tpu.matmul %79, %43, %cst_27 {dimension_numbers = #tpu.dot_dimension_numbers<[1], [0], [0], [1], [0, 0, 1, 1], [], []>} : vector<64x64xbf16>, vector<64x64xbf16>, vector<64x64xf32> -> vector<64x64xf32>
    %81 = vector.shape_cast %80 : vector<64x64xf32> to vector<8x8x64xf32>
    %82 = arith.addf %76, %81 : vector<8x8x64xf32>
    %83 = vector.extract_strided_slice %71 {offsets = [2, 0, 0], sizes = [8, 8, 64], strides = [1, 1, 1]} : vector<10x8x64xf32> to vector<8x8x64xf32>
    %84 = vector.shape_cast %83 : vector<8x8x64xf32> to vector<64x64xf32>
    %85 = arith.truncf %84 : vector<64x64xf32> to vector<64x64xbf16>
    %cst_28 = arith.constant dense<0.000000e+00> : vector<64x64xf32>
    %86 = tpu.matmul %85, %44, %cst_28 {dimension_numbers = #tpu.dot_dimension_numbers<[1], [0], [0], [1], [0, 0, 1, 1], [], []>} : vector<64x64xbf16>, vector<64x64xbf16>, vector<64x64xf32> -> vector<64x64xf32>
    %87 = vector.shape_cast %86 : vector<64x64xf32> to vector<8x8x64xf32>
    %88 = arith.addf %82, %87 : vector<8x8x64xf32>
    %c1_29 = arith.constant 1 : index
    %c0_30 = arith.constant 0 : index
    %89 = vector.load %arg5[%c1_29, %c0_30] : memref<2x64xf32, #tpu.memory_space<vmem>>, vector<1x64xf32>
    %90 = vector.shape_cast %89 : vector<1x64xf32> to vector<1x1x64xf32>
    %91 = arith.addf %88, %69 : vector<8x8x64xf32>
    %92 = vector.broadcast %90 : vector<1x1x64xf32> to vector<8x8x64xf32>
    %93 = arith.addf %91, %92 : vector<8x8x64xf32>
    %cst_31 = arith.constant 0.000000e+00 : f32
    %94 = vector.broadcast %cst_31 : f32 to vector<8x8x64xf32>
    %95 = arith.maximumf %93, %94 : vector<8x8x64xf32>
    %cst_32 = arith.constant 0.000000e+00 : f32
    %96 = vector.broadcast %cst_32 : f32 to vector<1x8x64xf32>
    %97 = tpu.concatenate %96, %95, %96 in 0 : vector<1x8x64xf32>, vector<8x8x64xf32>, vector<1x8x64xf32> -> vector<10x8x64xf32>
    %98 = vector.shape_cast %97 : vector<10x8x64xf32> to vector<5x2x8x64xf32>
    %99 = vector.extract_strided_slice %98 {offsets = [0, 0, 0, 0], sizes = [5, 1, 8, 64], strides = [1, 1, 1, 1]} : vector<5x2x8x64xf32> to vector<5x1x8x64xf32>
    %100 = vector.shape_cast %99 : vector<5x1x8x64xf32> to vector<5x8x64xf32>
    %101 = vector.extract_strided_slice %98 {offsets = [0, 1, 0, 0], sizes = [5, 1, 8, 64], strides = [1, 1, 1, 1]} : vector<5x2x8x64xf32> to vector<5x1x8x64xf32>
    %102 = vector.shape_cast %101 : vector<5x1x8x64xf32> to vector<5x8x64xf32>
    %103 = vector.extract_strided_slice %100 {offsets = [0, 0, 0], sizes = [4, 8, 64], strides = [1, 1, 1]} : vector<5x8x64xf32> to vector<4x8x64xf32>
    %104 = vector.extract_strided_slice %102 {offsets = [0, 0, 0], sizes = [4, 8, 64], strides = [1, 1, 1]} : vector<5x8x64xf32> to vector<4x8x64xf32>
    %105 = vector.extract_strided_slice %100 {offsets = [1, 0, 0], sizes = [4, 8, 64], strides = [1, 1, 1]} : vector<5x8x64xf32> to vector<4x8x64xf32>
    %c0_33 = arith.constant 0 : index
    %c0_34 = arith.constant 0 : index
    %106 = vector.load %arg6[%c0_33, %c0_34] : memref<640x128xbf16, #tpu.memory_space<vmem>>, vector<64x128xbf16>
    %c64_35 = arith.constant 64 : index
    %c0_36 = arith.constant 0 : index
    %107 = vector.load %arg6[%c64_35, %c0_36] : memref<640x128xbf16, #tpu.memory_space<vmem>>, vector<64x128xbf16>
    %c128 = arith.constant 128 : index
    %c0_37 = arith.constant 0 : index
    %108 = vector.load %arg6[%c128, %c0_37] : memref<640x128xbf16, #tpu.memory_space<vmem>>, vector<64x128xbf16>
    %c192 = arith.constant 192 : index
    %c0_38 = arith.constant 0 : index
    %109 = vector.load %arg6[%c192, %c0_38] : memref<640x128xbf16, #tpu.memory_space<vmem>>, vector<128x128xbf16>
    %c320 = arith.constant 320 : index
    %c0_39 = arith.constant 0 : index
    %110 = vector.load %arg6[%c320, %c0_39] : memref<640x128xbf16, #tpu.memory_space<vmem>>, vector<128x128xbf16>
    %c448 = arith.constant 448 : index
    %c0_40 = arith.constant 0 : index
    %111 = vector.load %arg6[%c448, %c0_40] : memref<640x128xbf16, #tpu.memory_space<vmem>>, vector<128x128xbf16>
    %c576 = arith.constant 576 : index
    %c0_41 = arith.constant 0 : index
    %112 = vector.load %arg6[%c576, %c0_41] : memref<640x128xbf16, #tpu.memory_space<vmem>>, vector<64x128xbf16>
    %113 = vector.shape_cast %103 : vector<4x8x64xf32> to vector<32x64xf32>
    %114 = arith.truncf %113 : vector<32x64xf32> to vector<32x64xbf16>
    %cst_42 = arith.constant dense<0.000000e+00> : vector<32x128xf32>
    %115 = tpu.matmul %114, %106, %cst_42 {dimension_numbers = #tpu.dot_dimension_numbers<[1], [0], [0], [1], [0, 0, 1, 1], [], []>} : vector<32x64xbf16>, vector<64x128xbf16>, vector<32x128xf32> -> vector<32x128xf32>
    %116 = vector.shape_cast %115 : vector<32x128xf32> to vector<4x8x128xf32>
    %117 = vector.shape_cast %104 : vector<4x8x64xf32> to vector<32x64xf32>
    %118 = arith.truncf %117 : vector<32x64xf32> to vector<32x64xbf16>
    %cst_43 = arith.constant dense<0.000000e+00> : vector<32x128xf32>
    %119 = tpu.matmul %118, %107, %cst_43 {dimension_numbers = #tpu.dot_dimension_numbers<[1], [0], [0], [1], [0, 0, 1, 1], [], []>} : vector<32x64xbf16>, vector<64x128xbf16>, vector<32x128xf32> -> vector<32x128xf32>
    %120 = vector.shape_cast %119 : vector<32x128xf32> to vector<4x8x128xf32>
    %121 = arith.addf %116, %120 : vector<4x8x128xf32>
    %122 = vector.shape_cast %105 : vector<4x8x64xf32> to vector<32x64xf32>
    %123 = arith.truncf %122 : vector<32x64xf32> to vector<32x64xbf16>
    %cst_44 = arith.constant dense<0.000000e+00> : vector<32x128xf32>
    %124 = tpu.matmul %123, %108, %cst_44 {dimension_numbers = #tpu.dot_dimension_numbers<[1], [0], [0], [1], [0, 0, 1, 1], [], []>} : vector<32x64xbf16>, vector<64x128xbf16>, vector<32x128xf32> -> vector<32x128xf32>
    %125 = vector.shape_cast %124 : vector<32x128xf32> to vector<4x8x128xf32>
    %126 = arith.addf %121, %125 : vector<4x8x128xf32>
    %c0_45 = arith.constant 0 : index
    %c0_46 = arith.constant 0 : index
    %127 = vector.load %arg7[%c0_45, %c0_46] : memref<2x128xf32, #tpu.memory_space<vmem>>, vector<1x128xf32>
    %128 = vector.shape_cast %127 : vector<1x128xf32> to vector<1x1x128xf32>
    %129 = vector.broadcast %128 : vector<1x1x128xf32> to vector<4x8x128xf32>
    %130 = arith.addf %126, %129 : vector<4x8x128xf32>
    %cst_47 = arith.constant 0.000000e+00 : f32
    %131 = vector.broadcast %cst_47 : f32 to vector<4x8x128xf32>
    %132 = arith.maximumf %130, %131 : vector<4x8x128xf32>
    %133 = vector.shape_cast %104 : vector<4x8x64xf32> to vector<32x64xf32>
    %134 = arith.truncf %133 : vector<32x64xf32> to vector<32x64xbf16>
    %cst_48 = arith.constant dense<0.000000e+00> : vector<32x128xf32>
    %135 = tpu.matmul %134, %112, %cst_48 {dimension_numbers = #tpu.dot_dimension_numbers<[1], [0], [0], [1], [0, 0, 1, 1], [], []>} : vector<32x64xbf16>, vector<64x128xbf16>, vector<32x128xf32> -> vector<32x128xf32>
    %136 = vector.shape_cast %135 : vector<32x128xf32> to vector<4x8x128xf32>
    %cst_49 = arith.constant 0.000000e+00 : f32
    %137 = vector.broadcast %cst_49 : f32 to vector<1x8x128xf32>
    %138 = tpu.concatenate %137, %132, %137 in 0 : vector<1x8x128xf32>, vector<4x8x128xf32>, vector<1x8x128xf32> -> vector<6x8x128xf32>
    %139 = vector.extract_strided_slice %138 {offsets = [0, 0, 0], sizes = [4, 8, 128], strides = [1, 1, 1]} : vector<6x8x128xf32> to vector<4x8x128xf32>
    %140 = vector.shape_cast %139 : vector<4x8x128xf32> to vector<32x128xf32>
    %141 = arith.truncf %140 : vector<32x128xf32> to vector<32x128xbf16>
    %cst_50 = arith.constant dense<0.000000e+00> : vector<32x128xf32>
    %142 = tpu.matmul %141, %109, %cst_50 {dimension_numbers = #tpu.dot_dimension_numbers<[1], [0], [0], [1], [0, 0, 1, 1], [], []>} : vector<32x128xbf16>, vector<128x128xbf16>, vector<32x128xf32> -> vector<32x128xf32>
    %143 = vector.shape_cast %142 : vector<32x128xf32> to vector<4x8x128xf32>
    %144 = vector.extract_strided_slice %138 {offsets = [1, 0, 0], sizes = [4, 8, 128], strides = [1, 1, 1]} : vector<6x8x128xf32> to vector<4x8x128xf32>
    %145 = vector.shape_cast %144 : vector<4x8x128xf32> to vector<32x128xf32>
    %146 = arith.truncf %145 : vector<32x128xf32> to vector<32x128xbf16>
    %cst_51 = arith.constant dense<0.000000e+00> : vector<32x128xf32>
    %147 = tpu.matmul %146, %110, %cst_51 {dimension_numbers = #tpu.dot_dimension_numbers<[1], [0], [0], [1], [0, 0, 1, 1], [], []>} : vector<32x128xbf16>, vector<128x128xbf16>, vector<32x128xf32> -> vector<32x128xf32>
    %148 = vector.shape_cast %147 : vector<32x128xf32> to vector<4x8x128xf32>
    %149 = arith.addf %143, %148 : vector<4x8x128xf32>
    %150 = vector.extract_strided_slice %138 {offsets = [2, 0, 0], sizes = [4, 8, 128], strides = [1, 1, 1]} : vector<6x8x128xf32> to vector<4x8x128xf32>
    %151 = vector.shape_cast %150 : vector<4x8x128xf32> to vector<32x128xf32>
    %152 = arith.truncf %151 : vector<32x128xf32> to vector<32x128xbf16>
    %cst_52 = arith.constant dense<0.000000e+00> : vector<32x128xf32>
    %153 = tpu.matmul %152, %111, %cst_52 {dimension_numbers = #tpu.dot_dimension_numbers<[1], [0], [0], [1], [0, 0, 1, 1], [], []>} : vector<32x128xbf16>, vector<128x128xbf16>, vector<32x128xf32> -> vector<32x128xf32>
    %154 = vector.shape_cast %153 : vector<32x128xf32> to vector<4x8x128xf32>
    %155 = arith.addf %149, %154 : vector<4x8x128xf32>
    %c1_53 = arith.constant 1 : index
    %c0_54 = arith.constant 0 : index
    %156 = vector.load %arg7[%c1_53, %c0_54] : memref<2x128xf32, #tpu.memory_space<vmem>>, vector<1x128xf32>
    %157 = vector.shape_cast %156 : vector<1x128xf32> to vector<1x1x128xf32>
    %158 = arith.addf %155, %136 : vector<4x8x128xf32>
    %159 = vector.broadcast %157 : vector<1x1x128xf32> to vector<4x8x128xf32>
    %160 = arith.addf %158, %159 : vector<4x8x128xf32>
    %cst_55 = arith.constant 0.000000e+00 : f32
    %161 = vector.broadcast %cst_55 : f32 to vector<4x8x128xf32>
    %162 = arith.maximumf %160, %161 : vector<4x8x128xf32>
    %cst_56 = arith.constant 0.000000e+00 : f32
    %163 = vector.broadcast %cst_56 : f32 to vector<1x8x128xf32>
    %164 = tpu.concatenate %163, %162, %163 in 0 : vector<1x8x128xf32>, vector<4x8x128xf32>, vector<1x8x128xf32> -> vector<6x8x128xf32>
    %165 = vector.shape_cast %164 : vector<6x8x128xf32> to vector<3x2x8x128xf32>
    %166 = vector.extract_strided_slice %165 {offsets = [0, 0, 0, 0], sizes = [3, 1, 8, 128], strides = [1, 1, 1, 1]} : vector<3x2x8x128xf32> to vector<3x1x8x128xf32>
    %167 = vector.shape_cast %166 : vector<3x1x8x128xf32> to vector<3x8x128xf32>
    %168 = vector.extract_strided_slice %165 {offsets = [0, 1, 0, 0], sizes = [3, 1, 8, 128], strides = [1, 1, 1, 1]} : vector<3x2x8x128xf32> to vector<3x1x8x128xf32>
    %169 = vector.shape_cast %168 : vector<3x1x8x128xf32> to vector<3x8x128xf32>
    %170 = vector.extract_strided_slice %167 {offsets = [0, 0, 0], sizes = [2, 8, 128], strides = [1, 1, 1]} : vector<3x8x128xf32> to vector<2x8x128xf32>
    %171 = vector.extract_strided_slice %169 {offsets = [0, 0, 0], sizes = [2, 8, 128], strides = [1, 1, 1]} : vector<3x8x128xf32> to vector<2x8x128xf32>
    %172 = vector.extract_strided_slice %167 {offsets = [1, 0, 0], sizes = [2, 8, 128], strides = [1, 1, 1]} : vector<3x8x128xf32> to vector<2x8x128xf32>
    %c0_57 = arith.constant 0 : index
    %c0_58 = arith.constant 0 : index
    %173 = vector.load %arg8[%c0_57, %c0_58] : memref<1280x256xbf16, #tpu.memory_space<vmem>>, vector<128x256xbf16>
    %c128_59 = arith.constant 128 : index
    %c0_60 = arith.constant 0 : index
    %174 = vector.load %arg8[%c128_59, %c0_60] : memref<1280x256xbf16, #tpu.memory_space<vmem>>, vector<128x256xbf16>
    %c256 = arith.constant 256 : index
    %c0_61 = arith.constant 0 : index
    %175 = vector.load %arg8[%c256, %c0_61] : memref<1280x256xbf16, #tpu.memory_space<vmem>>, vector<128x256xbf16>
    %c384 = arith.constant 384 : index
    %c0_62 = arith.constant 0 : index
    %176 = vector.load %arg8[%c384, %c0_62] : memref<1280x256xbf16, #tpu.memory_space<vmem>>, vector<256x256xbf16>
    %c640 = arith.constant 640 : index
    %c0_63 = arith.constant 0 : index
    %177 = vector.load %arg8[%c640, %c0_63] : memref<1280x256xbf16, #tpu.memory_space<vmem>>, vector<256x256xbf16>
    %c896 = arith.constant 896 : index
    %c0_64 = arith.constant 0 : index
    %178 = vector.load %arg8[%c896, %c0_64] : memref<1280x256xbf16, #tpu.memory_space<vmem>>, vector<256x256xbf16>
    %c1152 = arith.constant 1152 : index
    %c0_65 = arith.constant 0 : index
    %179 = vector.load %arg8[%c1152, %c0_65] : memref<1280x256xbf16, #tpu.memory_space<vmem>>, vector<128x256xbf16>
    %180 = vector.shape_cast %170 : vector<2x8x128xf32> to vector<16x128xf32>
    %181 = arith.truncf %180 : vector<16x128xf32> to vector<16x128xbf16>
    %cst_66 = arith.constant dense<0.000000e+00> : vector<16x256xf32>
    %182 = tpu.matmul %181, %173, %cst_66 {dimension_numbers = #tpu.dot_dimension_numbers<[1], [0], [0], [1], [0, 0, 1, 1], [], []>} : vector<16x128xbf16>, vector<128x256xbf16>, vector<16x256xf32> -> vector<16x256xf32>
    %183 = vector.shape_cast %182 : vector<16x256xf32> to vector<2x8x256xf32>
    %184 = vector.shape_cast %171 : vector<2x8x128xf32> to vector<16x128xf32>
    %185 = arith.truncf %184 : vector<16x128xf32> to vector<16x128xbf16>
    %cst_67 = arith.constant dense<0.000000e+00> : vector<16x256xf32>
    %186 = tpu.matmul %185, %174, %cst_67 {dimension_numbers = #tpu.dot_dimension_numbers<[1], [0], [0], [1], [0, 0, 1, 1], [], []>} : vector<16x128xbf16>, vector<128x256xbf16>, vector<16x256xf32> -> vector<16x256xf32>
    %187 = vector.shape_cast %186 : vector<16x256xf32> to vector<2x8x256xf32>
    %188 = arith.addf %183, %187 : vector<2x8x256xf32>
    %189 = vector.shape_cast %172 : vector<2x8x128xf32> to vector<16x128xf32>
    %190 = arith.truncf %189 : vector<16x128xf32> to vector<16x128xbf16>
    %cst_68 = arith.constant dense<0.000000e+00> : vector<16x256xf32>
    %191 = tpu.matmul %190, %175, %cst_68 {dimension_numbers = #tpu.dot_dimension_numbers<[1], [0], [0], [1], [0, 0, 1, 1], [], []>} : vector<16x128xbf16>, vector<128x256xbf16>, vector<16x256xf32> -> vector<16x256xf32>
    %192 = vector.shape_cast %191 : vector<16x256xf32> to vector<2x8x256xf32>
    %193 = arith.addf %188, %192 : vector<2x8x256xf32>
    %c0_69 = arith.constant 0 : index
    %c0_70 = arith.constant 0 : index
    %194 = vector.load %arg9[%c0_69, %c0_70] : memref<2x256xf32, #tpu.memory_space<vmem>>, vector<1x256xf32>
    %195 = vector.shape_cast %194 : vector<1x256xf32> to vector<1x1x256xf32>
    %196 = vector.broadcast %195 : vector<1x1x256xf32> to vector<2x8x256xf32>
    %197 = arith.addf %193, %196 : vector<2x8x256xf32>
    %cst_71 = arith.constant 0.000000e+00 : f32
    %198 = vector.broadcast %cst_71 : f32 to vector<2x8x256xf32>
    %199 = arith.maximumf %197, %198 : vector<2x8x256xf32>
    %200 = vector.shape_cast %171 : vector<2x8x128xf32> to vector<16x128xf32>
    %201 = arith.truncf %200 : vector<16x128xf32> to vector<16x128xbf16>
    %cst_72 = arith.constant dense<0.000000e+00> : vector<16x256xf32>
    %202 = tpu.matmul %201, %179, %cst_72 {dimension_numbers = #tpu.dot_dimension_numbers<[1], [0], [0], [1], [0, 0, 1, 1], [], []>} : vector<16x128xbf16>, vector<128x256xbf16>, vector<16x256xf32> -> vector<16x256xf32>
    %203 = vector.shape_cast %202 : vector<16x256xf32> to vector<2x8x256xf32>
    %cst_73 = arith.constant 0.000000e+00 : f32
    %204 = vector.broadcast %cst_73 : f32 to vector<1x8x256xf32>
    %205 = tpu.concatenate %204, %199, %204 in 0 : vector<1x8x256xf32>, vector<2x8x256xf32>, vector<1x8x256xf32> -> vector<4x8x256xf32>
    %206 = vector.extract_strided_slice %205 {offsets = [0, 0, 0], sizes = [2, 8, 256], strides = [1, 1, 1]} : vector<4x8x256xf32> to vector<2x8x256xf32>
    %207 = vector.shape_cast %206 : vector<2x8x256xf32> to vector<16x256xf32>
    %208 = arith.truncf %207 : vector<16x256xf32> to vector<16x256xbf16>
    %cst_74 = arith.constant dense<0.000000e+00> : vector<16x256xf32>
    %209 = tpu.matmul %208, %176, %cst_74 {dimension_numbers = #tpu.dot_dimension_numbers<[1], [0], [0], [1], [0, 0, 1, 1], [], []>} : vector<16x256xbf16>, vector<256x256xbf16>, vector<16x256xf32> -> vector<16x256xf32>
    %210 = vector.shape_cast %209 : vector<16x256xf32> to vector<2x8x256xf32>
    %211 = vector.extract_strided_slice %205 {offsets = [1, 0, 0], sizes = [2, 8, 256], strides = [1, 1, 1]} : vector<4x8x256xf32> to vector<2x8x256xf32>
    %212 = vector.shape_cast %211 : vector<2x8x256xf32> to vector<16x256xf32>
    %213 = arith.truncf %212 : vector<16x256xf32> to vector<16x256xbf16>
    %cst_75 = arith.constant dense<0.000000e+00> : vector<16x256xf32>
    %214 = tpu.matmul %213, %177, %cst_75 {dimension_numbers = #tpu.dot_dimension_numbers<[1], [0], [0], [1], [0, 0, 1, 1], [], []>} : vector<16x256xbf16>, vector<256x256xbf16>, vector<16x256xf32> -> vector<16x256xf32>
    %215 = vector.shape_cast %214 : vector<16x256xf32> to vector<2x8x256xf32>
    %216 = arith.addf %210, %215 : vector<2x8x256xf32>
    %217 = vector.extract_strided_slice %205 {offsets = [2, 0, 0], sizes = [2, 8, 256], strides = [1, 1, 1]} : vector<4x8x256xf32> to vector<2x8x256xf32>
    %218 = vector.shape_cast %217 : vector<2x8x256xf32> to vector<16x256xf32>
    %219 = arith.truncf %218 : vector<16x256xf32> to vector<16x256xbf16>
    %cst_76 = arith.constant dense<0.000000e+00> : vector<16x256xf32>
    %220 = tpu.matmul %219, %178, %cst_76 {dimension_numbers = #tpu.dot_dimension_numbers<[1], [0], [0], [1], [0, 0, 1, 1], [], []>} : vector<16x256xbf16>, vector<256x256xbf16>, vector<16x256xf32> -> vector<16x256xf32>
    %221 = vector.shape_cast %220 : vector<16x256xf32> to vector<2x8x256xf32>
    %222 = arith.addf %216, %221 : vector<2x8x256xf32>
    %c1_77 = arith.constant 1 : index
    %c0_78 = arith.constant 0 : index
    %223 = vector.load %arg9[%c1_77, %c0_78] : memref<2x256xf32, #tpu.memory_space<vmem>>, vector<1x256xf32>
    %224 = vector.shape_cast %223 : vector<1x256xf32> to vector<1x1x256xf32>
    %225 = arith.addf %222, %203 : vector<2x8x256xf32>
    %226 = vector.broadcast %224 : vector<1x1x256xf32> to vector<2x8x256xf32>
    %227 = arith.addf %225, %226 : vector<2x8x256xf32>
    %cst_79 = arith.constant 0.000000e+00 : f32
    %228 = vector.broadcast %cst_79 : f32 to vector<2x8x256xf32>
    %229 = arith.maximumf %227, %228 : vector<2x8x256xf32>
    %cst_80 = arith.constant dense<0.000000e+00> : vector<8x256xf32>
    %230 = vector.multi_reduction <add>, %229, %cst_80 [0] : vector<2x8x256xf32> to vector<8x256xf32>
    %cst_81 = arith.constant 5.000000e-01 : f32
    %231 = vector.broadcast %cst_81 : f32 to vector<8x256xf32>
    %232 = arith.mulf %230, %231 : vector<8x256xf32>
    %233 = arith.truncf %232 : vector<8x256xf32> to vector<8x256xbf16>
    %c0_82 = arith.constant 0 : index
    %c0_83 = arith.constant 0 : index
    %234 = vector.load %arg10[%c0_82, %c0_83] : memref<256x2xbf16, #tpu.memory_space<vmem>>, vector<256x2xbf16>
    %cst_84 = arith.constant dense<0.000000e+00> : vector<8x2xf32>
    %235 = tpu.matmul %233, %234, %cst_84 {dimension_numbers = #tpu.dot_dimension_numbers<[1], [0], [0], [1], [0, 0, 1, 1], [], []>} : vector<8x256xbf16>, vector<256x2xbf16>, vector<8x2xf32> -> vector<8x2xf32>
    %c0_85 = arith.constant 0 : index
    %c0_86 = arith.constant 0 : index
    %236 = vector.load %arg11[%c0_85, %c0_86] : memref<1x2xf32, #tpu.memory_space<vmem>>, vector<1x2xf32>
    %237 = vector.broadcast %236 : vector<1x2xf32> to vector<8x2xf32>
    %238 = arith.addf %235, %237 : vector<8x2xf32>
    %c0_87 = arith.constant 0 : index
    %c0_88 = arith.constant 0 : index
    %239 = vector.load %arg12[%c0_87, %c0_88] : memref<8x2xf32, #tpu.memory_space<vmem>>, vector<8x2xf32>
    tpu.vector_store %arg12[%c0_87, %c0_88], %238 {strides = array<i32>} : memref<8x2xf32, #tpu.memory_space<vmem>>, vector<8x2xf32>,
    return
  }
  func.func @transform_0(%arg0: i32) -> (i32, i32, i32) {
    %c0_i32 = arith.constant 0 : i32
    %c0_i32_0 = arith.constant 0 : i32
    %c0_i32_1 = arith.constant 0 : i32
    return %c0_i32, %arg0, %c0_i32_0 : i32, i32, i32
  }
  func.func @transform_1(%arg0: i32) -> (i32, i32) {
    %c0_i32 = arith.constant 0 : i32
    %c0_i32_0 = arith.constant 0 : i32
    %c0_i32_1 = arith.constant 0 : i32
    return %c0_i32, %c0_i32_0 : i32, i32
  }
  func.func @transform_2(%arg0: i32) -> (i32, i32) {
    %c0_i32 = arith.constant 0 : i32
    %c0_i32_0 = arith.constant 0 : i32
    %c0_i32_1 = arith.constant 0 : i32
    return %c0_i32, %c0_i32_0 : i32, i32
  }
  func.func @transform_3(%arg0: i32) -> (i32, i32) {
    %c0_i32 = arith.constant 0 : i32
    %c0_i32_0 = arith.constant 0 : i32
    %c0_i32_1 = arith.constant 0 : i32
    return %c0_i32, %c0_i32_0 : i32, i32
  }
  func.func @transform_4(%arg0: i32) -> (i32, i32) {
    %c0_i32 = arith.constant 0 : i32
    %c0_i32_0 = arith.constant 0 : i32
    %c0_i32_1 = arith.constant 0 : i32
    return %c0_i32, %c0_i32_0 : i32, i32
  }
  func.func @transform_5(%arg0: i32) -> (i32, i32) {
    %c0_i32 = arith.constant 0 : i32
    %c0_i32_0 = arith.constant 0 : i32
    %c0_i32_1 = arith.constant 0 : i32
    return %c0_i32, %c0_i32_0 : i32, i32
  }
  func.func @transform_6(%arg0: i32) -> (i32, i32) {
    %c0_i32 = arith.constant 0 : i32
    %c0_i32_0 = arith.constant 0 : i32
    %c0_i32_1 = arith.constant 0 : i32
    return %c0_i32, %c0_i32_0 : i32, i32
  }
  func.func @transform_7(%arg0: i32) -> (i32, i32) {
    %c0_i32 = arith.constant 0 : i32
    %c0_i32_0 = arith.constant 0 : i32
    %c0_i32_1 = arith.constant 0 : i32
    return %c0_i32, %c0_i32_0 : i32, i32
  }
  func.func @transform_8(%arg0: i32) -> (i32, i32) {
    %c0_i32 = arith.constant 0 : i32
    %c0_i32_0 = arith.constant 0 : i32
    %c0_i32_1 = arith.constant 0 : i32
    return %c0_i32, %c0_i32_0 : i32, i32
  }
  func.func @transform_9(%arg0: i32) -> (i32, i32) {
    %c0_i32 = arith.constant 0 : i32
    %c0_i32_0 = arith.constant 0 : i32
    %c0_i32_1 = arith.constant 0 : i32
    return %c0_i32, %c0_i32_0 : i32, i32
  }
  func.func @transform_10(%arg0: i32) -> (i32, i32) {
    %c0_i32 = arith.constant 0 : i32
    %c0_i32_0 = arith.constant 0 : i32
    %c0_i32_1 = arith.constant 0 : i32
    return %c0_i32, %c0_i32_0 : i32, i32
  }
  func.func @transform_11(%arg0: i32) -> (i32, i32) {
    %c0_i32 = arith.constant 0 : i32
    %c0_i32_0 = arith.constant 0 : i32
    return %arg0, %c0_i32 : i32, i32
  }
}

</mosaic_0001>

<llo_original>
// kernel: resnet1d_forward.1
$region0: #{resnet1d_forward.1}
  #allocation0 [shape = 'u32[]', space=smem, size = 0x4, offset = 0x4, fixed_abs, tag = 'smem constant byte address 0x4 - core index']
  #allocation1 [shape = 'u32[72,128]{1,0:T(1,128)}', space=vmem, size = 0x9000, scoped, tag = 'internal scratch']
  %s0 = inlined_call_operand.vmem [shape: f32[18,8,1], index: 0, kind: input, shape index: {}]
  %s1 = inlined_call_operand.vmem [shape: f32[3,32], index: 1, kind: input, shape index: {}]
  %s2 = inlined_call_operand.vmem [shape: f32[1,32], index: 2, kind: input, shape index: {}]
  %s3 = inlined_call_operand.vmem [shape: bf16[320,64], index: 3, kind: input, shape index: {}]
  %s4 = inlined_call_operand.vmem [shape: f32[2,64], index: 4, kind: input, shape index: {}]
  %s5 = inlined_call_operand.hbm [shape: bf16[640,128], index: 5, kind: input, shape index: {}]
  %s6 = inlined_call_operand.vmem [shape: f32[2,128], index: 6, kind: input, shape index: {}]
  %s7 = inlined_call_operand.hbm [shape: bf16[1280,256], index: 7, kind: input, shape index: {}]
  %s8 = inlined_call_operand.vmem [shape: f32[2,256], index: 8, kind: input, shape index: {}]
  %s9 = inlined_call_operand.vmem [shape: bf16[256,2], index: 9, kind: input, shape index: {}]
  %s10 = inlined_call_operand.vmem [shape: f32[1,2], index: 10, kind: input, shape index: {}]
  %s11 = inlined_call_operand.vmem [shape: f32[8,2], index: 11, kind: output, shape index: {}]
  %s12 = sld [smem:[#allocation0]]
  $region62: #{resnet1d_forward.1} parent=0
    _
  %s14 = ssub.s32 1, %s12
  %s15 = scalar_select 0, %s14, %s12
  $region1: #{resnet1d_forward.1} parent=0
    #allocation2 [shape = 'u8[163840]{0}', space=vmem, size = 0x28000, scoped, tag = 'input window, operand 5, single buffered']
    #allocation3 [shape = 's32[1]{0}', space=sflag, size = 0x4, scoped, tag = 'scoped memory for resnet1d_forward.1']
    #allocation4 [shape = 'u8[655360]{0}', space=vmem, size = 0xa0000, scoped, tag = 'input window, operand 7, single buffered']
    #allocation5 [shape = 's32[1]{0}', space=sflag, size = 0x4, scoped, tag = 'scoped memory for resnet1d_forward.1']
    %16 = vsyncpa [#allocation3], 0
    %17 = vsyncpa [#allocation5], 0
    // Predicated region
    $region2: #{resnet1d_forward.1} parent=1 // pred_check
      _
    $region3: #{resnet1d_forward.1} parent=1 // pred_check_branch
      %19 = sbr.rel (0) target = $region5
    $region4: #{resnet1d_forward.1} parent=1 // pred_region
      _
    $region5: #{resnet1d_forward.1} parent=1 // pred_fallthru
      _
    // Predicated region
    $region6: #{resnet1d_forward.1} parent=1 // pred_check
      _
    $region7: #{resnet1d_forward.1} parent=1 // pred_check_branch
      %21 = sbr.rel (0) target = $region9
    $region8: #{resnet1d_forward.1} parent=1 // pred_region
      _
    $region9: #{resnet1d_forward.1} parent=1 // pred_fallthru
      _
    // Predicated region
    $region10: #{resnet1d_forward.1} parent=1 // pred_check
      _
    $region11: #{resnet1d_forward.1} parent=1 // pred_check_branch
      %23 = sbr.rel (0) target = $region13
    $region12: #{resnet1d_forward.1} parent=1 // pred_region
      _
    $region13: #{resnet1d_forward.1} parent=1 // pred_fallthru
      _
    // Predicated region
    $region14: #{resnet1d_forward.1} parent=1 // pred_check
      _
    $region15: #{resnet1d_forward.1} parent=1 // pred_check_branch
      %25 = sbr.rel (0) target = $region17
    $region16: #{resnet1d_forward.1} parent=1 // pred_region
      _
    $region17: #{resnet1d_forward.1} parent=1 // pred_fallthru
      _
    // Predicated region
    $region18: #{resnet1d_forward.1} parent=1 // pred_check
      _
    $region19: #{resnet1d_forward.1} parent=1 // pred_check_branch
      %27 = sbr.rel (0) target = $region21
    $region20: #{resnet1d_forward.1} parent=1 // pred_region
      _
    $region21: #{resnet1d_forward.1} parent=1 // pred_fallthru
      _
    // Predicated region
    $region22: #{resnet1d_forward.1} parent=1 // pred_check
      _
    $region23: #{resnet1d_forward.1} parent=1 // pred_check_branch
      %29 = sbr.rel (0) target = $region25
    $region24: #{resnet1d_forward.1} parent=1 // pred_region
      %31 = vsyncadd [#allocation3], 0
      %s32 = sshll.u32 %s5, 4
      %s33 = int_to_ptr.hbm [resolvable:$true] %s32
      %s34 = sshll.u32 [#allocation2], 4
      %s35 = int_to_ptr.vmem [resolvable:$true] %s34
      %40 = dma.hbm_to_vmem [thread:$0]  %s33, 5120, %s35, [#allocation3], 64, 64, 4
    $region25: #{resnet1d_forward.1} parent=1 // pred_fallthru
      _
    // Predicated region
    $region26: #{resnet1d_forward.1} parent=1 // pred_check
      _
    $region27: #{resnet1d_forward.1} parent=1 // pred_check_branch
      %42 = sbr.rel (0) target = $region29
    $region28: #{resnet1d_forward.1} parent=1 // pred_region
      _
    $region29: #{resnet1d_forward.1} parent=1 // pred_fallthru
      _
    // Predicated region
    $region30: #{resnet1d_forward.1} parent=1 // pred_check
      _
    $region31: #{resnet1d_forward.1} parent=1 // pred_check_branch
      %44 = sbr.rel (0) target = $region33
    $region32: #{resnet1d_forward.1} parent=1 // pred_region
      %46 = vsyncadd [#allocation5], 0
      %s47 = sshll.u32 %s7, 4
      %s48 = int_to_ptr.hbm [resolvable:$true] %s47
      %s49 = sshll.u32 [#allocation4], 4
      %s50 = int_to_ptr.vmem [resolvable:$true] %s49
      %55 = dma.hbm_to_vmem [thread:$0]  %s48, 20480, %s50, [#allocation5], 128, 128, 8
    $region33: #{resnet1d_forward.1} parent=1 // pred_fallthru
      _
    // Predicated region
    $region34: #{resnet1d_forward.1} parent=1 // pred_check
      _
    $region35: #{resnet1d_forward.1} parent=1 // pred_check_branch
      %57 = sbr.rel (0) target = $region37
    $region36: #{resnet1d_forward.1} parent=1 // pred_region
      _
    $region37: #{resnet1d_forward.1} parent=1 // pred_fallthru
      _
    // Predicated region
    $region38: #{resnet1d_forward.1} parent=1 // pred_check
      _
    $region39: #{resnet1d_forward.1} parent=1 // pred_check_branch
      %59 = sbr.rel (0) target = $region41
    $region40: #{resnet1d_forward.1} parent=1 // pred_region
      _
    $region41: #{resnet1d_forward.1} parent=1 // pred_fallthru
      _
    // Predicated region
    $region42: #{resnet1d_forward.1} parent=1 // pred_check
      _
    $region43: #{resnet1d_forward.1} parent=1 // pred_check_branch
      %61 = sbr.rel (0) target = $region45
    $region44: #{resnet1d_forward.1} parent=1 // pred_region
      _
    $region45: #{resnet1d_forward.1} parent=1 // pred_fallthru
      _
    // Predicated region
    $region46: #{resnet1d_forward.1} parent=1 // pred_check
      _
    $region47: #{resnet1d_forward.1} parent=1 // pred_check_branch
      %63 = sbr.rel (0) target = $region49
    $region48: #{resnet1d_forward.1} parent=1 // pred_region
      %65 = dma.done [#allocation3], 5120
    $region49: #{resnet1d_forward.1} parent=1 // pred_fallthru
      _
    // Predicated region
    $region50: #{resnet1d_forward.1} parent=1 // pred_check
      _
    $region51: #{resnet1d_forward.1} parent=1 // pred_check_branch
      %67 = sbr.rel (0) target = $region53
    $region52: #{resnet1d_forward.1} parent=1 // pred_region
      %69 = dma.done [#allocation5], 20480
    $region53: #{resnet1d_forward.1} parent=1 // pred_fallthru
      _
    %v71 = vld [vmem:[%s0] sm:$0xff]
    %v72 = vld [vmem:[%s0 + $0x8] sm:$0xff]
    %v73 = vld [vmem:[%s0 + $0x10] sm:$0xff]
    %v74 = vld [vmem:[%s0 + $0x18] sm:$0xff]
    %v75 = vld [vmem:[%s0 + $0x20] sm:$0xff]
    %v76 = vld [vmem:[%s0 + $0x28] sm:$0xff]
    %v77 = vld [vmem:[%s0 + $0x30] sm:$0xff]
    %v78 = vld [vmem:[%s0 + $0x38] sm:$0xff]
    %v79 = vld [vmem:[%s0 + $0x40] sm:$0xff]
    %v80 = vld [vmem:[%s0 + $0x48] sm:$0xff]
    %v81 = vld [vmem:[%s0 + $0x50] sm:$0xff]
    %v82 = vld [vmem:[%s0 + $0x58] sm:$0xff]
    %v83 = vld [vmem:[%s0 + $0x60] sm:$0xff]
    %v84 = vld [vmem:[%s0 + $0x68] sm:$0xff]
    %v85 = vld [vmem:[%s0 + $0x70] sm:$0xff]
    %v86 = vld [vmem:[%s0 + $0x78] sm:$0xff]
    %v87 = vld [vmem:[%s0 + $0x80] sm:$0xff]
    %v88 = vld [vmem:[%s0 + $0x88] sm:$0xff]
    %v89 = vld [vmem:[%s1] sm:$0x1]
    %91 = vset.pattern.permute.xlu0 0
    %92 = vperm.xlu0 %91, %v71
    %v93 = vpop.permute.xlu0 %92
    %96 = vset.pattern.permute.xlu0 0
    %97 = vperm.xlu0 %96, %v72
    %v98 = vpop.permute.xlu0 %97
    %101 = vset.pattern.permute.xlu0 0
    %102 = vperm.xlu0 %101, %v73
    %v103 = vpop.permute.xlu0 %102
    %106 = vset.pattern.permute.xlu0 0
    %107 = vperm.xlu0 %106, %v74
    %v108 = vpop.permute.xlu0 %107
    %111 = vset.pattern.permute.xlu0 0
    %112 = vperm.xlu0 %111, %v75
    %v113 = vpop.permute.xlu0 %112
    %116 = vset.pattern.permute.xlu0 0
    %117 = vperm.xlu0 %116, %v76
    %v118 = vpop.permute.xlu0 %117
    %121 = vset.pattern.permute.xlu0 0
    %122 = vperm.xlu0 %121, %v77
    %v123 = vpop.permute.xlu0 %122
    %126 = vset.pattern.permute.xlu0 0
    %127 = vperm.xlu0 %126, %v78
    %v128 = vpop.permute.xlu0 %127
    %131 = vset.pattern.permute.xlu0 0
    %132 = vperm.xlu0 %131, %v79
    %v133 = vpop.permute.xlu0 %132
    %136 = vset.pattern.permute.xlu0 0
    %137 = vperm.xlu0 %136, %v80
    %v138 = vpop.permute.xlu0 %137
    %141 = vset.pattern.permute.xlu0 0
    %142 = vperm.xlu0 %141, %v81
    %v143 = vpop.permute.xlu0 %142
    %146 = vset.pattern.permute.xlu0 0
    %147 = vperm.xlu0 %146, %v82
    %v148 = vpop.permute.xlu0 %147
    %151 = vset.pattern.permute.xlu0 0
    %152 = vperm.xlu0 %151, %v83
    %v153 = vpop.permute.xlu0 %152
    %156 = vset.pattern.permute.xlu0 0
    %157 = vperm.xlu0 %156, %v84
    %v158 = vpop.permute.xlu0 %157
    %161 = vset.pattern.permute.xlu0 0
    %162 = vperm.xlu0 %161, %v85
    %v163 = vpop.permute.xlu0 %162
    %166 = vset.pattern.permute.xlu0 0
    %167 = vperm.xlu0 %166, %v86
    %v168 = vpop.permute.xlu0 %167
    %v170 = vperm.slane %v89, 0
    %v171 = vmul.f32 %v93, %v170
    %v172 = vmul.f32 %v98, %v170
    %v173 = vmul.f32 %v103, %v170
    %v174 = vmul.f32 %v108, %v170
    %v175 = vmul.f32 %v113, %v170
    %v176 = vmul.f32 %v118, %v170
    %v177 = vmul.f32 %v123, %v170
    %v178 = vmul.f32 %v128, %v170
    %v179 = vmul.f32 %v133, %v170
    %v180 = vmul.f32 %v138, %v170
    %v181 = vmul.f32 %v143, %v170
    %v182 = vmul.f32 %v148, %v170
    %v183 = vmul.f32 %v153, %v170
    %v184 = vmul.f32 %v158, %v170
    %v185 = vmul.f32 %v163, %v170
    %v186 = vmul.f32 %v168, %v170
    %v187 = vadd.f32 %v171, 0.0
    %v188 = vadd.f32 %v172, 0.0
    %v189 = vadd.f32 %v173, 0.0
    %v190 = vadd.f32 %v174, 0.0
    %v191 = vadd.f32 %v175, 0.0
    %v192 = vadd.f32 %v176, 0.0
    %v193 = vadd.f32 %v177, 0.0
    %v194 = vadd.f32 %v178, 0.0
    %v195 = vadd.f32 %v179, 0.0
    %v196 = vadd.f32 %v180, 0.0
    %v197 = vadd.f32 %v181, 0.0
    %v198 = vadd.f32 %v182, 0.0
    %v199 = vadd.f32 %v183, 0.0
    %v200 = vadd.f32 %v184, 0.0
    %v201 = vadd.f32 %v185, 0.0
    %v202 = vadd.f32 %v186, 0.0
    %v203 = vld [vmem:[%s1 + $0x1] sm:$0x1]
    %205 = vset.pattern.permute.xlu0 0
    %206 = vperm.xlu0 %205, %v87
    %v207 = vpop.permute.xlu0 %206
    %v209 = vperm.slane %v203, 0
    %v210 = vmul.f32 %v98, %v209
    %v211 = vmul.f32 %v103, %v209
    %v212 = vmul.f32 %v108, %v209
    %v213 = vmul.f32 %v113, %v209
    %v214 = vmul.f32 %v118, %v209
    %v215 = vmul.f32 %v123, %v209
    %v216 = vmul.f32 %v128, %v209
    %v217 = vmul.f32 %v133, %v209
    %v218 = vmul.f32 %v138, %v209
    %v219 = vmul.f32 %v143, %v209
    %v220 = vmul.f32 %v148, %v209
    %v221 = vmul.f32 %v153, %v209
    %v222 = vmul.f32 %v158, %v209
    %v223 = vmul.f32 %v163, %v209
    %v224 = vmul.f32 %v168, %v209
    %v225 = vmul.f32 %v207, %v209
    %v226 = vadd.f32 %v187, %v210
    %v227 = vadd.f32 %v188, %v211
    %v228 = vadd.f32 %v189, %v212
    %v229 = vadd.f32 %v190, %v213
    %v230 = vadd.f32 %v191, %v214
    %v231 = vadd.f32 %v192, %v215
    %v232 = vadd.f32 %v193, %v216
    %v233 = vadd.f32 %v194, %v217
    %v234 = vadd.f32 %v195, %v218
    %v235 = vadd.f32 %v196, %v219
    %v236 = vadd.f32 %v197, %v220
    %v237 = vadd.f32 %v198, %v221
    %v238 = vadd.f32 %v199, %v222
    %v239 = vadd.f32 %v200, %v223
    %v240 = vadd.f32 %v201, %v224
    %v241 = vadd.f32 %v202, %v225
    %v242 = vld [vmem:[%s1 + $0x2] sm:$0x1]
    %244 = vset.pattern.permute.xlu0 0
    %245 = vperm.xlu0 %244, %v88
    %v246 = vpop.permute.xlu0 %245
    %v248 = vperm.slane %v242, 0
    %v249 = vmul.f32 %v103, %v248
    %v250 = vmul.f32 %v108, %v248
    %v251 = vmul.f32 %v113, %v248
    %v252 = vmul.f32 %v118, %v248
    %v253 = vmul.f32 %v123, %v248
    %v254 = vmul.f32 %v128, %v248
    %v255 = vmul.f32 %v133, %v248
    %v256 = vmul.f32 %v138, %v248
    %v257 = vmul.f32 %v143, %v248
    %v258 = vmul.f32 %v148, %v248
    %v259 = vmul.f32 %v153, %v248
    %v260 = vmul.f32 %v158, %v248
    %v261 = vmul.f32 %v163, %v248
    %v262 = vmul.f32 %v168, %v248
    %v263 = vmul.f32 %v207, %v248
    %v264 = vmul.f32 %v246, %v248
    %v265 = vadd.f32 %v226, %v249
    %v266 = vadd.f32 %v227, %v250
    %v267 = vadd.f32 %v228, %v251
    %v268 = vadd.f32 %v229, %v252
    %v269 = vadd.f32 %v230, %v253
    %v270 = vadd.f32 %v231, %v254
    %v271 = vadd.f32 %v232, %v255
    %v272 = vadd.f32 %v233, %v256
    %v273 = vadd.f32 %v234, %v257
    %v274 = vadd.f32 %v235, %v258
    %v275 = vadd.f32 %v236, %v259
    %v276 = vadd.f32 %v237, %v260
    %v277 = vadd.f32 %v238, %v261
    %v278 = vadd.f32 %v239, %v262
    %v279 = vadd.f32 %v240, %v263
    %v280 = vadd.f32 %v241, %v264
    %v281 = vld [vmem:[%s2] sm:$0x1]
    %v283 = vperm.slane %v281, 0
    %v285 = vadd.f32 %v265, %v283
    %v286 = vadd.f32 %v266, %v283
    %v287 = vadd.f32 %v267, %v283
    %v288 = vadd.f32 %v268, %v283
    %v289 = vadd.f32 %v269, %v283
    %v290 = vadd.f32 %v270, %v283
    %v291 = vadd.f32 %v271, %v283
    %v292 = vadd.f32 %v272, %v283
    %v293 = vadd.f32 %v273, %v283
    %v294 = vadd.f32 %v274, %v283
    %v295 = vadd.f32 %v275, %v283
    %v296 = vadd.f32 %v276, %v283
    %v297 = vadd.f32 %v277, %v283
    %v298 = vadd.f32 %v278, %v283
    %v299 = vadd.f32 %v279, %v283
    %v300 = vadd.f32 %v280, %v283
    %v301 = vmax.f32 %v285, 0.0
    %v302 = vmax.f32 %v286, 0.0
    %v303 = vmax.f32 %v287, 0.0
    %v304 = vmax.f32 %v288, 0.0
    %v305 = vmax.f32 %v289, 0.0
    %v306 = vmax.f32 %v290, 0.0
    %v307 = vmax.f32 %v291, 0.0
    %v308 = vmax.f32 %v292, 0.0
    %v309 = vmax.f32 %v293, 0.0
    %v310 = vmax.f32 %v294, 0.0
    %v311 = vmax.f32 %v295, 0.0
    %v312 = vmax.f32 %v296, 0.0
    %v313 = vmax.f32 %v297, 0.0
    %v314 = vmax.f32 %v298, 0.0
    %v315 = vmax.f32 %v299, 0.0
    %v316 = vmax.f32 %v300, 0.0
    %v317 = vld [vmem:[%s3] sm:$0xf]
    %v318 = vld [vmem:[%s3 + $0x4] sm:$0xf]
    %v319 = vld [vmem:[%s3 + $0x8] sm:$0xf]
    %v320 = vld [vmem:[%s3 + $0xc] sm:$0xf]
    %v321 = vld [vmem:[%s3 + $0x10] sm:$0xf]
    %v322 = vld [vmem:[%s3 + $0x14] sm:$0xf]
    %v323 = vld [vmem:[%s3 + $0x18] sm:$0xf]
    %v324 = vld [vmem:[%s3 + $0x1c] sm:$0xf]
    %v325 = vld [vmem:[%s3 + $0x20] sm:$0xf]
    %v326 = vld [vmem:[%s3 + $0x24] sm:$0xf]
    %v327 = vld [vmem:[%s3 + $0x28] sm:$0xf]
    %v328 = vld [vmem:[%s3 + $0x2c] sm:$0xf]
    %v329 = vld [vmem:[%s3 + $0x30] sm:$0xf]
    %v330 = vld [vmem:[%s3 + $0x34] sm:$0xf]
    %v331 = vld [vmem:[%s3 + $0x38] sm:$0xf]
    %v332 = vld [vmem:[%s3 + $0x3c] sm:$0xf]
    %v333 = vld [vmem:[%s3 + $0x40] sm:$0xf]
    %v334 = vld [vmem:[%s3 + $0x44] sm:$0xf]
    %v335 = vld [vmem:[%s3 + $0x48] sm:$0xf]
    %v336 = vld [vmem:[%s3 + $0x4c] sm:$0xf]
    %v337 = vld [vmem:[%s3 + $0x50] sm:$0xf]
    %v338 = vld [vmem:[%s3 + $0x54] sm:$0xf]
    %v339 = vld [vmem:[%s3 + $0x58] sm:$0xf]
    %v340 = vld [vmem:[%s3 + $0x5c] sm:$0xf]
    %v341 = vld [vmem:[%s3 + $0x60] sm:$0xf]
    %v342 = vld [vmem:[%s3 + $0x64] sm:$0xf]
    %v343 = vld [vmem:[%s3 + $0x68] sm:$0xf]
    %v344 = vld [vmem:[%s3 + $0x6c] sm:$0xf]
    %v345 = vld [vmem:[%s3 + $0x70] sm:$0xf]
    %v346 = vld [vmem:[%s3 + $0x74] sm:$0xf]
    %v347 = vld [vmem:[%s3 + $0x78] sm:$0xf]
    %v348 = vld [vmem:[%s3 + $0x7c] sm:$0xf]
    %v349 = vld [vmem:[%s3 + $0x80] sm:$0xf]
    %v350 = vld [vmem:[%s3 + $0x84] sm:$0xf]
    %v351 = vld [vmem:[%s3 + $0x88] sm:$0xf]
    %v352 = vld [vmem:[%s3 + $0x8c] sm:$0xf]
    %v353 = vld [vmem:[%s3 + $0x90] sm:$0xf]
    %v354 = vld [vmem:[%s3 + $0x94] sm:$0xf]
    %v355 = vld [vmem:[%s3 + $0x98] sm:$0xf]
    %v356 = vld [vmem:[%s3 + $0x9c] sm:$0xf]
    %v357 = vpack.c.bf16 %v302, 0.0
    %v358 = vpack.c.bf16 %v306, %v304
    %v359 = vpack.c.bf16 %v310, %v308
    %v360 = vpack.c.bf16 %v314, %v312
    %v365 = vunpack.c.l.b16 %v317
    %v366 = vunpack.c.l.b16 %v318
    %v367 = vunpack.c.l.b16 %v319
    %v368 = vunpack.c.l.b16 %v320
    %v369 = vpack.c.b16 %v366, %v365
    %v370 = vpack.c.b16 %v368, %v367
    %vm373 = vcmask 261120
    %v375 = vsel %vm373, %v357, 0
    %v378 = vsel %vm373, %v358, 0
    %v381 = vsel %vm373, %v359, 0
    %v384 = vsel %vm373, %v360, 0
    %386 = vmatpush.bf16.msra.mxu0 0
    %387 = vmatpush.bf16.msra.mxu0 0
    %388 = vmatpush.bf16.msra.mxu0 0
    %389 = vmatpush.bf16.msra.mxu0 0
    %390 = vmatpush.bf16.msra.mxu0 0
    %391 = vmatpush.bf16.msra.mxu0 0
    %392 = vmatpush.bf16.msra.mxu0 %v370
    %393 = vmatpush.bf16.msra.mxu0 %v369
    %394 = vmatmul.bf16.gmra.mxu0 %v375
    %v395 = vpop.f32.mrf.mxu0
    %v396 = vadd.f32 0.0, %v395
    %v397 = vpop.f32.mrf.mxu0
    %v398 = vadd.f32 0.0, %v397
    %399 = vmatmul.bf16.gmra.mxu0 %v378
    %v400 = vpop.f32.mrf.mxu0
    %v401 = vadd.f32 0.0, %v400
    %v402 = vpop.f32.mrf.mxu0
    %v403 = vadd.f32 0.0, %v402
    %404 = vmatmul.bf16.gmra.mxu0 %v381
    %v405 = vpop.f32.mrf.mxu0
    %v406 = vadd.f32 0.0, %v405
    %v407 = vpop.f32.mrf.mxu0
    %v408 = vadd.f32 0.0, %v407
    %409 = vmatmul.bf16.gmra.mxu0 %v384
    %v410 = vpop.f32.mrf.mxu0
    %v411 = vadd.f32 0.0, %v410
    %v412 = vpop.f32.mrf.mxu0
    %v413 = vadd.f32 0.0, %v412
    %414 = vdwg.mxu0
    %v415 = vpack.c.bf16 %v303, %v301
    %v416 = vpack.c.bf16 %v307, %v305
    %v417 = vpack.c.bf16 %v311, %v309
    %v418 = vpack.c.bf16 %v315, %v313
    %v423 = vunpack.c.l.b16 %v321
    %v424 = vunpack.c.l.b16 %v322
    %v425 = vunpack.c.l.b16 %v323
    %v426 = vunpack.c.l.b16 %v324
    %v427 = vpack.c.b16 %v424, %v423
    %v428 = vpack.c.b16 %v426, %v425
    %v432 = vsel %vm373, %v415, 0
    %v435 = vsel %vm373, %v416, 0
    %v438 = vsel %vm373, %v417, 0
    %v441 = vsel %vm373, %v418, 0
    %443 = vmatpush.bf16.msra.mxu0 0
    %444 = vmatpush.bf16.msra.mxu0 0
    %445 = vmatpush.bf16.msra.mxu0 0
    %446 = vmatpush.bf16.msra.mxu0 0
    %447 = vmatpush.bf16.msra.mxu0 0
    %448 = vmatpush.bf16.msra.mxu0 0
    %449 = vmatpush.bf16.msra.mxu0 %v428
    %450 = vmatpush.bf16.msra.mxu0 %v427
    %451 = vmatmul.bf16.gmra.mxu0 %v432
    %v452 = vpop.f32.mrf.mxu0
    %v453 = vadd.f32 0.0, %v452
    %v454 = vpop.f32.mrf.mxu0
    %v455 = vadd.f32 0.0, %v454
    %456 = vmatmul.bf16.gmra.mxu0 %v435
    %v457 = vpop.f32.mrf.mxu0
    %v458 = vadd.f32 0.0, %v457
    %v459 = vpop.f32.mrf.mxu0
    %v460 = vadd.f32 0.0, %v459
    %461 = vmatmul.bf16.gmra.mxu0 %v438
    %v462 = vpop.f32.mrf.mxu0
    %v463 = vadd.f32 0.0, %v462
    %v464 = vpop.f32.mrf.mxu0
    %v465 = vadd.f32 0.0, %v464
    %466 = vmatmul.bf16.gmra.mxu0 %v441
    %v467 = vpop.f32.mrf.mxu0
    %v468 = vadd.f32 0.0, %v467
    %v469 = vpop.f32.mrf.mxu0
    %v470 = vadd.f32 0.0, %v469
    %471 = vdwg.mxu0
    %v472 = vadd.f32 %v396, %v453
    %v473 = vadd.f32 %v398, %v455
    %v474 = vadd.f32 %v401, %v458
    %v475 = vadd.f32 %v403, %v460
    %v476 = vadd.f32 %v406, %v463
    %v477 = vadd.f32 %v408, %v465
    %v478 = vadd.f32 %v411, %v468
    %v479 = vadd.f32 %v413, %v470
    %v480 = vpack.c.bf16 %v304, %v302
    %v481 = vpack.c.bf16 %v308, %v306
    %v482 = vpack.c.bf16 %v312, %v310
    %v483 = vpack.c.bf16 %v316, %v314
    %v488 = vunpack.c.l.b16 %v325
    %v489 = vunpack.c.l.b16 %v326
    %v490 = vunpack.c.l.b16 %v327
    %v491 = vunpack.c.l.b16 %v328
    %v492 = vpack.c.b16 %v489, %v488
    %v493 = vpack.c.b16 %v491, %v490
    %v497 = vsel %vm373, %v480, 0
    %v500 = vsel %vm373, %v481, 0
    %v503 = vsel %vm373, %v482, 0
    %v506 = vsel %vm373, %v483, 0
    %508 = vmatpush.bf16.msra.mxu0 0
    %509 = vmatpush.bf16.msra.mxu0 0
    %510 = vmatpush.bf16.msra.mxu0 0
    %511 = vmatpush.bf16.msra.mxu0 0
    %512 = vmatpush.bf16.msra.mxu0 0
    %513 = vmatpush.bf16.msra.mxu0 0
    %514 = vmatpush.bf16.msra.mxu0 %v493
    %515 = vmatpush.bf16.msra.mxu0 %v492
    %516 = vmatmul.bf16.gmra.mxu0 %v497
    %v517 = vpop.f32.mrf.mxu0
    %v518 = vadd.f32 0.0, %v517
    %v519 = vpop.f32.mrf.mxu0
    %v520 = vadd.f32 0.0, %v519
    %521 = vmatmul.bf16.gmra.mxu0 %v500
    %v522 = vpop.f32.mrf.mxu0
    %v523 = vadd.f32 0.0, %v522
    %v524 = vpop.f32.mrf.mxu0
    %v525 = vadd.f32 0.0, %v524
    %526 = vmatmul.bf16.gmra.mxu0 %v503
    %v527 = vpop.f32.mrf.mxu0
    %v528 = vadd.f32 0.0, %v527
    %v529 = vpop.f32.mrf.mxu0
    %v530 = vadd.f32 0.0, %v529
    %531 = vmatmul.bf16.gmra.mxu0 %v506
    %v532 = vpop.f32.mrf.mxu0
    %v533 = vadd.f32 0.0, %v532
    %v534 = vpop.f32.mrf.mxu0
    %v535 = vadd.f32 0.0, %v534
    %536 = vdwg.mxu0
    %v537 = vadd.f32 %v472, %v518
    %v538 = vadd.f32 %v473, %v520
    %v539 = vadd.f32 %v474, %v523
    %v540 = vadd.f32 %v475, %v525
    %v541 = vadd.f32 %v476, %v528
    %v542 = vadd.f32 %v477, %v530
    %v543 = vadd.f32 %v478, %v533
    %v544 = vadd.f32 %v479, %v535
    %v545 = vld [vmem:[%s4] sm:$0x1]
    %v546 = vperm.slane %v545, 0
    %v547 = vadd.f32 %v537, %v546
    %v548 = vadd.f32 %v538, %v546
    %v549 = vadd.f32 %v539, %v546
    %v550 = vadd.f32 %v540, %v546
    %v551 = vadd.f32 %v541, %v546
    %v552 = vadd.f32 %v542, %v546
    %v553 = vadd.f32 %v543, %v546
    %v554 = vadd.f32 %v544, %v546
    %v555 = vmax.f32 %v547, 0.0
    %v556 = vmax.f32 %v548, 0.0
    %v557 = vmax.f32 %v549, 0.0
    %v558 = vmax.f32 %v550, 0.0
    %v559 = vmax.f32 %v551, 0.0
    %v560 = vmax.f32 %v552, 0.0
    %v561 = vmax.f32 %v553, 0.0
    %v562 = vmax.f32 %v554, 0.0
    %v567 = vunpack.c.l.b16 %v353
    %v568 = vunpack.c.l.b16 %v354
    %v569 = vunpack.c.l.b16 %v355
    %v570 = vunpack.c.l.b16 %v356
    %v571 = vpack.c.b16 %v568, %v567
    %v572 = vpack.c.b16 %v570, %v569
    %575 = vmatpush.bf16.msra.mxu0 0
    %576 = vmatpush.bf16.msra.mxu0 0
    %577 = vmatpush.bf16.msra.mxu0 0
    %578 = vmatpush.bf16.msra.mxu0 0
    %579 = vmatpush.bf16.msra.mxu0 0
    %580 = vmatpush.bf16.msra.mxu0 0
    %581 = vmatpush.bf16.msra.mxu0 %v572
    %582 = vmatpush.bf16.msra.mxu0 %v571
    %583 = vmatmul.bf16.gmra.mxu0 %v432
    %v584 = vpop.f32.mrf.mxu0
    %v585 = vadd.f32 0.0, %v584
    %v586 = vpop.f32.mrf.mxu0
    %v587 = vadd.f32 0.0, %v586
    %588 = vmatmul.bf16.gmra.mxu0 %v435
    %v589 = vpop.f32.mrf.mxu0
    %v590 = vadd.f32 0.0, %v589
    %v591 = vpop.f32.mrf.mxu0
    %v592 = vadd.f32 0.0, %v591
    %593 = vmatmul.bf16.gmra.mxu0 %v438
    %v594 = vpop.f32.mrf.mxu0
    %v595 = vadd.f32 0.0, %v594
    %v596 = vpop.f32.mrf.mxu0
    %v597 = vadd.f32 0.0, %v596
    %598 = vmatmul.bf16.gmra.mxu0 %v441
    %v599 = vpop.f32.mrf.mxu0
    %v600 = vadd.f32 0.0, %v599
    %v601 = vpop.f32.mrf.mxu0
    %v602 = vadd.f32 0.0, %v601
    %603 = vdwg.mxu0
    %v604 = vpack.c.bf16 %v555, 0.0
    %v605 = vpack.c.bf16 %v557, %v556
    %v606 = vpack.c.bf16 %v559, %v558
    %v607 = vpack.c.bf16 %v561, %v560
    %v616 = vunpack.c.l.b16 %v329
    %v617 = vunpack.c.l.b16 %v330
    %v618 = vunpack.c.l.b16 %v331
    %v619 = vunpack.c.l.b16 %v332
    %v620 = vunpack.c.l.b16 %v333
    %v621 = vunpack.c.l.b16 %v334
    %v622 = vunpack.c.l.b16 %v335
    %v623 = vunpack.c.l.b16 %v336
    %v624 = vpack.c.b16 %v617, %v616
    %v625 = vpack.c.b16 %v619, %v618
    %v626 = vpack.c.b16 %v621, %v620
    %v627 = vpack.c.b16 %v623, %v622
    %vm632 = vcmask 523264
    %v634 = vsel %vm632, %v604, 0
    %v637 = vsel %vm632, %v605, 0
    %v640 = vsel %vm632, %v606, 0
    %v643 = vsel %vm632, %v607, 0
    %645 = vmatpush.bf16.msra.mxu0 0
    %646 = vmatpush.bf16.msra.mxu0 0
    %647 = vmatpush.bf16.msra.mxu0 0
    %648 = vmatpush.bf16.msra.mxu0 0
    %649 = vmatpush.bf16.msra.mxu0 %v627
    %650 = vmatpush.bf16.msra.mxu0 %v626
    %651 = vmatpush.bf16.msra.mxu0 %v625
    %652 = vmatpush.bf16.msra.mxu0 %v624
    %653 = vmatmul.bf16.gmra.mxu0 %v634
    %v654 = vpop.f32.mrf.mxu0
    %v655 = vadd.f32 0.0, %v654
    %v656 = vpop.f32.mrf.mxu0
    %v657 = vadd.f32 0.0, %v656
    %658 = vmatmul.bf16.gmra.mxu0 %v637
    %v659 = vpop.f32.mrf.mxu0
    %v660 = vadd.f32 0.0, %v659
    %v661 = vpop.f32.mrf.mxu0
    %v662 = vadd.f32 0.0, %v661
    %663 = vmatmul.bf16.gmra.mxu0 %v640
    %v664 = vpop.f32.mrf.mxu0
    %v665 = vadd.f32 0.0, %v664
    %v666 = vpop.f32.mrf.mxu0
    %v667 = vadd.f32 0.0, %v666
    %668 = vmatmul.bf16.gmra.mxu0 %v643
    %v669 = vpop.f32.mrf.mxu0
    %v670 = vadd.f32 0.0, %v669
    %v671 = vpop.f32.mrf.mxu0
    %v672 = vadd.f32 0.0, %v671
    %673 = vdwg.mxu0
    %v674 = vpack.c.bf16 %v556, %v555
    %v675 = vpack.c.bf16 %v558, %v557
    %v676 = vpack.c.bf16 %v560, %v559
    %v677 = vpack.c.bf16 %v562, %v561
    %v686 = vunpack.c.l.b16 %v337
    %v687 = vunpack.c.l.b16 %v338
    %v688 = vunpack.c.l.b16 %v339
    %v689 = vunpack.c.l.b16 %v340
    %v690 = vunpack.c.l.b16 %v341
    %v691 = vunpack.c.l.b16 %v342
    %v692 = vunpack.c.l.b16 %v343
    %v693 = vunpack.c.l.b16 %v344
    %v694 = vpack.c.b16 %v687, %v686
    %v695 = vpack.c.b16 %v689, %v688
    %v696 = vpack.c.b16 %v691, %v690
    %v697 = vpack.c.b16 %v693, %v692
    %v703 = vsel %vm632, %v674, 0
    %v706 = vsel %vm632, %v675, 0
    %v709 = vsel %vm632, %v676, 0
    %v712 = vsel %vm632, %v677, 0
    %714 = vmatpush.bf16.msra.mxu0 0
    %715 = vmatpush.bf16.msra.mxu0 0
    %716 = vmatpush.bf16.msra.mxu0 0
    %717 = vmatpush.bf16.msra.mxu0 0
    %718 = vmatpush.bf16.msra.mxu0 %v697
    %719 = vmatpush.bf16.msra.mxu0 %v696
    %720 = vmatpush.bf16.msra.mxu0 %v695
    %721 = vmatpush.bf16.msra.mxu0 %v694
    %722 = vmatmul.bf16.gmra.mxu0 %v703
    %v723 = vpop.f32.mrf.mxu0
    %v724 = vadd.f32 0.0, %v723
    %v725 = vpop.f32.mrf.mxu0
    %v726 = vadd.f32 0.0, %v725
    %727 = vmatmul.bf16.gmra.mxu0 %v706
    %v728 = vpop.f32.mrf.mxu0
    %v729 = vadd.f32 0.0, %v728
    %v730 = vpop.f32.mrf.mxu0
    %v731 = vadd.f32 0.0, %v730
    %732 = vmatmul.bf16.gmra.mxu0 %v709
    %v733 = vpop.f32.mrf.mxu0
    %v734 = vadd.f32 0.0, %v733
    %v735 = vpop.f32.mrf.mxu0
    %v736 = vadd.f32 0.0, %v735
    %737 = vmatmul.bf16.gmra.mxu0 %v712
    %v738 = vpop.f32.mrf.mxu0
    %v739 = vadd.f32 0.0, %v738
    %v740 = vpop.f32.mrf.mxu0
    %v741 = vadd.f32 0.0, %v740
    %742 = vdwg.mxu0
    %v743 = vadd.f32 %v655, %v724
    %v744 = vadd.f32 %v657, %v726
    %v745 = vadd.f32 %v660, %v729
    %v746 = vadd.f32 %v662, %v731
    %v747 = vadd.f32 %v665, %v734
    %v748 = vadd.f32 %v667, %v736
    %v749 = vadd.f32 %v670, %v739
    %v750 = vadd.f32 %v672, %v741
    %v751 = vpack.c.bf16 0.0, %v562
    %v760 = vunpack.c.l.b16 %v345
    %v761 = vunpack.c.l.b16 %v346
    %v762 = vunpack.c.l.b16 %v347
    %v763 = vunpack.c.l.b16 %v348
    %v764 = vunpack.c.l.b16 %v349
    %v765 = vunpack.c.l.b16 %v350
    %v766 = vunpack.c.l.b16 %v351
    %v767 = vunpack.c.l.b16 %v352
    %v768 = vpack.c.b16 %v761, %v760
    %v769 = vpack.c.b16 %v763, %v762
    %v770 = vpack.c.b16 %v765, %v764
    %v771 = vpack.c.b16 %v767, %v766
    %v777 = vsel %vm632, %v751, 0
    %779 = vmatpush.bf16.msra.mxu0 0
    %780 = vmatpush.bf16.msra.mxu0 0
    %781 = vmatpush.bf16.msra.mxu0 0
    %782 = vmatpush.bf16.msra.mxu0 0
    %783 = vmatpush.bf16.msra.mxu0 %v771
    %784 = vmatpush.bf16.msra.mxu0 %v770
    %785 = vmatpush.bf16.msra.mxu0 %v769
    %786 = vmatpush.bf16.msra.mxu0 %v768
    %787 = vmatmul.bf16.gmra.mxu0 %v637
    %v788 = vpop.f32.mrf.mxu0
    %v789 = vadd.f32 0.0, %v788
    %v790 = vpop.f32.mrf.mxu0
    %v791 = vadd.f32 0.0, %v790
    %792 = vmatmul.bf16.gmra.mxu0 %v640
    %v793 = vpop.f32.mrf.mxu0
    %v794 = vadd.f32 0.0, %v793
    %v795 = vpop.f32.mrf.mxu0
    %v796 = vadd.f32 0.0, %v795
    %797 = vmatmul.bf16.gmra.mxu0 %v643
    %v798 = vpop.f32.mrf.mxu0
    %v799 = vadd.f32 0.0, %v798
    %v800 = vpop.f32.mrf.mxu0
    %v801 = vadd.f32 0.0, %v800
    %802 = vmatmul.bf16.gmra.mxu0 %v777
    %v803 = vpop.f32.mrf.mxu0
    %v804 = vadd.f32 0.0, %v803
    %v805 = vpop.f32.mrf.mxu0
    %v806 = vadd.f32 0.0, %v805
    %807 = vdwg.mxu0
    %v808 = vadd.f32 %v743, %v789
    %v809 = vadd.f32 %v744, %v791
    %v810 = vadd.f32 %v745, %v794
    %v811 = vadd.f32 %v746, %v796
    %v812 = vadd.f32 %v747, %v799
    %v813 = vadd.f32 %v748, %v801
    %v814 = vadd.f32 %v749, %v804
    %v815 = vadd.f32 %v750, %v806
    %v816 = vld [vmem:[%s4 + $0x1] sm:$0x1]
    %v817 = vadd.f32 %v808, %v585
    %v818 = vadd.f32 %v809, %v587
    %v819 = vadd.f32 %v810, %v590
    %v820 = vadd.f32 %v811, %v592
    %v821 = vadd.f32 %v812, %v595
    %v822 = vadd.f32 %v813, %v597
    %v823 = vadd.f32 %v814, %v600
    %v824 = vadd.f32 %v815, %v602
    %v825 = vperm.slane %v816, 0
    %v826 = vadd.f32 %v817, %v825
    %v827 = vadd.f32 %v818, %v825
    %v828 = vadd.f32 %v819, %v825
    %v829 = vadd.f32 %v820, %v825
    %v830 = vadd.f32 %v821, %v825
    %v831 = vadd.f32 %v822, %v825
    %v832 = vadd.f32 %v823, %v825
    %v833 = vadd.f32 %v824, %v825
    %v834 = vmax.f32 %v826, 0.0
    %v835 = vmax.f32 %v827, 0.0
    %v836 = vmax.f32 %v828, 0.0
    %v837 = vmax.f32 %v829, 0.0
    %v838 = vmax.f32 %v830, 0.0
    %v839 = vmax.f32 %v831, 0.0
    %v840 = vmax.f32 %v832, 0.0
    %v841 = vmax.f32 %v833, 0.0
    %v842 = vld [vmem:[#allocation2] sm:$0xf]
    %v843 = vld [vmem:[#allocation2 + $0x4] sm:$0xf]
    %v844 = vld [vmem:[#allocation2 + $0x8] sm:$0xf]
    %v845 = vld [vmem:[#allocation2 + $0xc] sm:$0xf]
    %v846 = vld [vmem:[#allocation2 + $0x10] sm:$0xf]
    %v847 = vld [vmem:[#allocation2 + $0x14] sm:$0xf]
    %v848 = vld [vmem:[#allocation2 + $0x18] sm:$0xf]
    %v849 = vld [vmem:[#allocation2 + $0x1c] sm:$0xf]
    %v850 = vld [vmem:[#allocation2 + $0x20] sm:$0xf]
    %v851 = vld [vmem:[#allocation2 + $0x24] sm:$0xf]
    %v852 = vld [vmem:[#allocation2 + $0x28] sm:$0xf]
    %v853 = vld [vmem:[#allocation2 + $0x2c] sm:$0xf]
    %v854 = vld [vmem:[#allocation2 + $0x30] sm:$0xf]
    %v855 = vld [vmem:[#allocation2 + $0x34] sm:$0xf]
    %v856 = vld [vmem:[#allocation2 + $0x38] sm:$0xf]
    %v857 = vld [vmem:[#allocation2 + $0x3c] sm:$0xf]
    %v858 = vld [vmem:[#allocation2 + $0x40] sm:$0xf]
    %v859 = vld [vmem:[#allocation2 + $0x44] sm:$0xf]
    %v860 = vld [vmem:[#allocation2 + $0x48] sm:$0xf]
    %v861 = vld [vmem:[#allocation2 + $0x4c] sm:$0xf]
    %v862 = vld [vmem:[#allocation2 + $0x50] sm:$0xf]
    %v863 = vld [vmem:[#allocation2 + $0x54] sm:$0xf]
    %v864 = vld [vmem:[#allocation2 + $0x58] sm:$0xf]
    %v865 = vld [vmem:[#allocation2 + $0x5c] sm:$0xf]
    %v866 = vld [vmem:[#allocation2 + $0x60] sm:$0xf]
    %v867 = vld [vmem:[#allocation2 + $0x64] sm:$0xf]
    %v868 = vld [vmem:[#allocation2 + $0x68] sm:$0xf]
    %v869 = vld [vmem:[#allocation2 + $0x6c] sm:$0xf]
    %v870 = vld [vmem:[#allocation2 + $0x70] sm:$0xf]
    %v871 = vld [vmem:[#allocation2 + $0x74] sm:$0xf]
    %v872 = vld [vmem:[#allocation2 + $0x78] sm:$0xf]
    %v873 = vld [vmem:[#allocation2 + $0x7c] sm:$0xf]
    %v874 = vld [vmem:[#allocation2 + $0x80] sm:$0xf]
    %v875 = vld [vmem:[#allocation2 + $0x84] sm:$0xf]
    %v876 = vld [vmem:[#allocation2 + $0x88] sm:$0xf]
    %v877 = vld [vmem:[#allocation2 + $0x8c] sm:$0xf]
    %v878 = vld [vmem:[#allocation2 + $0x90] sm:$0xf]
    %v879 = vld [vmem:[#allocation2 + $0x94] sm:$0xf]
    %v880 = vld [vmem:[#allocation2 + $0x98] sm:$0xf]
    %v881 = vld [vmem:[#allocation2 + $0x9c] sm:$0xf]
    %v882 = vld [vmem:[#allocation2 + $0xa0] sm:$0xf]
    %v883 = vld [vmem:[#allocation2 + $0xa4] sm:$0xf]
    %v884 = vld [vmem:[#allocation2 + $0xa8] sm:$0xf]
    %v885 = vld [vmem:[#allocation2 + $0xac] sm:$0xf]
    %v886 = vld [vmem:[#allocation2 + $0xb0] sm:$0xf]
    %v887 = vld [vmem:[#allocation2 + $0xb4] sm:$0xf]
    %v888 = vld [vmem:[#allocation2 + $0xb8] sm:$0xf]
    %v889 = vld [vmem:[#allocation2 + $0xbc] sm:$0xf]
    %v890 = vld [vmem:[#allocation2 + $0xc0] sm:$0xf]
    %v891 = vld [vmem:[#allocation2 + $0xc4] sm:$0xf]
    %v892 = vld [vmem:[#allocation2 + $0xc8] sm:$0xf]
    %v893 = vld [vmem:[#allocation2 + $0xcc] sm:$0xf]
    %v894 = vld [vmem:[#allocation2 + $0xd0] sm:$0xf]
    %v895 = vld [vmem:[#allocation2 + $0xd4] sm:$0xf]
    %v896 = vld [vmem:[#allocation2 + $0xd8] sm:$0xf]
    %v897 = vld [vmem:[#allocation2 + $0xdc] sm:$0xf]
    %v898 = vld [vmem:[#allocation2 + $0xe0] sm:$0xf]
    %v899 = vld [vmem:[#allocation2 + $0xe4] sm:$0xf]
    %v900 = vld [vmem:[#allocation2 + $0xe8] sm:$0xf]
    %v901 = vld [vmem:[#allocation2 + $0xec] sm:$0xf]
    %v902 = vld [vmem:[#allocation2 + $0xf0] sm:$0xf]
    %v903 = vld [vmem:[#allocation2 + $0xf4] sm:$0xf]
    %v904 = vld [vmem:[#allocation2 + $0xf8] sm:$0xf]
    %v905 = vld [vmem:[#allocation2 + $0xfc] sm:$0xf]
    %v906 = vld [vmem:[#allocation2 + $0x100] sm:$0xf]
    %v907 = vld [vmem:[#allocation2 + $0x104] sm:$0xf]
    %v908 = vld [vmem:[#allocation2 + $0x108] sm:$0xf]
    %v909 = vld [vmem:[#allocation2 + $0x10c] sm:$0xf]
    %v910 = vld [vmem:[#allocation2 + $0x110] sm:$0xf]
    %v911 = vld [vmem:[#allocation2 + $0x114] sm:$0xf]
    %v912 = vld [vmem:[#allocation2 + $0x118] sm:$0xf]
    %v913 = vld [vmem:[#allocation2 + $0x11c] sm:$0xf]
    %v914 = vld [vmem:[#allocation2 + $0x120] sm:$0xf]
    %v915 = vld [vmem:[#allocation2 + $0x124] sm:$0xf]
    %v916 = vld [vmem:[#allocation2 + $0x128] sm:$0xf]
    %v917 = vld [vmem:[#allocation2 + $0x12c] sm:$0xf]
    %v918 = vld [vmem:[#allocation2 + $0x130] sm:$0xf]
    %v919 = vld [vmem:[#allocation2 + $0x134] sm:$0xf]
    %v920 = vld [vmem:[#allocation2 + $0x138] sm:$0xf]
    %v921 = vld [vmem:[#allocation2 + $0x13c] sm:$0xf]
    %v922 = vpack.c.bf16 %v835, 0.0
    %v923 = vpack.c.bf16 %v839, %v837
    %v932 = vunpack.c.l.b16 %v842
    %v933 = vunpack.c.l.b16 %v843
    %v934 = vunpack.c.l.b16 %v844
    %v935 = vunpack.c.l.b16 %v845
    %v936 = vunpack.c.l.b16 %v846
    %v937 = vunpack.c.l.b16 %v847
    %v938 = vunpack.c.l.b16 %v848
    %v939 = vunpack.c.l.b16 %v849
    %v940 = vpack.c.b16 %v933, %v932
    %v941 = vpack.c.b16 %v935, %v934
    %v942 = vpack.c.b16 %v937, %v936
    %v943 = vpack.c.b16 %v939, %v938
    %v949 = vsel %vm632, %v922, 0
    %v952 = vsel %vm632, %v923, 0
    %954 = vmatpush.bf16.msra.mxu0 0
    %955 = vmatpush.bf16.msra.mxu0 0
    %956 = vmatpush.bf16.msra.mxu0 0
    %957 = vmatpush.bf16.msra.mxu0 0
    %958 = vmatpush.bf16.msra.mxu0 %v943
    %959 = vmatpush.bf16.msra.mxu0 %v942
    %960 = vmatpush.bf16.msra.mxu0 %v941
    %961 = vmatpush.bf16.msra.mxu0 %v940
    %962 = vmatmul.bf16.gmra.mxu0 %v949
    %v963 = vpop.f32.mrf.mxu0
    %v964 = vadd.f32 0.0, %v963
    %v965 = vpop.f32.mrf.mxu0
    %v966 = vadd.f32 0.0, %v965
    %967 = vmatmul.bf16.gmra.mxu0 %v952
    %v968 = vpop.f32.mrf.mxu0
    %v969 = vadd.f32 0.0, %v968
    %v970 = vpop.f32.mrf.mxu0
    %v971 = vadd.f32 0.0, %v970
    %972 = vdwg.mxu0
    %v973 = vpack.c.bf16 %v836, %v834
    %v974 = vpack.c.bf16 %v840, %v838
    %v983 = vunpack.c.l.b16 %v850
    %v984 = vunpack.c.l.b16 %v851
    %v985 = vunpack.c.l.b16 %v852
    %v986 = vunpack.c.l.b16 %v853
    %v987 = vunpack.c.l.b16 %v854
    %v988 = vunpack.c.l.b16 %v855
    %v989 = vunpack.c.l.b16 %v856
    %v990 = vunpack.c.l.b16 %v857
    %v991 = vpack.c.b16 %v984, %v983
    %v992 = vpack.c.b16 %v986, %v985
    %v993 = vpack.c.b16 %v988, %v987
    %v994 = vpack.c.b16 %v990, %v989
    %v1000 = vsel %vm632, %v973, 0
    %v1003 = vsel %vm632, %v974, 0
    %1005 = vmatpush.bf16.msra.mxu0 0
    %1006 = vmatpush.bf16.msra.mxu0 0
    %1007 = vmatpush.bf16.msra.mxu0 0
    %1008 = vmatpush.bf16.msra.mxu0 0
    %1009 = vmatpush.bf16.msra.mxu0 %v994
    %1010 = vmatpush.bf16.msra.mxu0 %v993
    %1011 = vmatpush.bf16.msra.mxu0 %v992
    %1012 = vmatpush.bf16.msra.mxu0 %v991
    %1013 = vmatmul.bf16.gmra.mxu0 %v1000
    %v1014 = vpop.f32.mrf.mxu0
    %v1015 = vadd.f32 0.0, %v1014
    %v1016 = vpop.f32.mrf.mxu0
    %v1017 = vadd.f32 0.0, %v1016
    %1018 = vmatmul.bf16.gmra.mxu0 %v1003
    %v1019 = vpop.f32.mrf.mxu0
    %v1020 = vadd.f32 0.0, %v1019
    %v1021 = vpop.f32.mrf.mxu0
    %v1022 = vadd.f32 0.0, %v1021
    %1023 = vdwg.mxu0
    %v1024 = vadd.f32 %v964, %v1015
    %v1025 = vadd.f32 %v966, %v1017
    %v1026 = vadd.f32 %v969, %v1020
    %v1027 = vadd.f32 %v971, %v1022
    %v1028 = vpack.c.bf16 %v837, %v835
    %v1029 = vpack.c.bf16 %v841, %v839
    %v1038 = vunpack.c.l.b16 %v858
    %v1039 = vunpack.c.l.b16 %v859
    %v1040 = vunpack.c.l.b16 %v860
    %v1041 = vunpack.c.l.b16 %v861
    %v1042 = vunpack.c.l.b16 %v862
    %v1043 = vunpack.c.l.b16 %v863
    %v1044 = vunpack.c.l.b16 %v864
    %v1045 = vunpack.c.l.b16 %v865
    %v1046 = vpack.c.b16 %v1039, %v1038
    %v1047 = vpack.c.b16 %v1041, %v1040
    %v1048 = vpack.c.b16 %v1043, %v1042
    %v1049 = vpack.c.b16 %v1045, %v1044
    %v1055 = vsel %vm632, %v1028, 0
    %v1058 = vsel %vm632, %v1029, 0
    %1060 = vmatpush.bf16.msra.mxu0 0
    %1061 = vmatpush.bf16.msra.mxu0 0
    %1062 = vmatpush.bf16.msra.mxu0 0
    %1063 = vmatpush.bf16.msra.mxu0 0
    %1064 = vmatpush.bf16.msra.mxu0 %v1049
    %1065 = vmatpush.bf16.msra.mxu0 %v1048
    %1066 = vmatpush.bf16.msra.mxu0 %v1047
    %1067 = vmatpush.bf16.msra.mxu0 %v1046
    %1068 = vmatmul.bf16.gmra.mxu0 %v1055
    %v1069 = vpop.f32.mrf.mxu0
    %v1070 = vadd.f32 0.0, %v1069
    %v1071 = vpop.f32.mrf.mxu0
    %v1072 = vadd.f32 0.0, %v1071
    %1073 = vmatmul.bf16.gmra.mxu0 %v1058
    %v1074 = vpop.f32.mrf.mxu0
    %v1075 = vadd.f32 0.0, %v1074
    %v1076 = vpop.f32.mrf.mxu0
    %v1077 = vadd.f32 0.0, %v1076
    %1078 = vdwg.mxu0
    %v1079 = vadd.f32 %v1024, %v1070
    %v1080 = vadd.f32 %v1025, %v1072
    %v1081 = vadd.f32 %v1026, %v1075
    %v1082 = vadd.f32 %v1027, %v1077
    %v1083 = vld [vmem:[%s6] sm:$0x1]
    %v1084 = vperm.slane %v1083, 0
    %v1085 = vadd.f32 %v1079, %v1084
    %v1086 = vadd.f32 %v1080, %v1084
    %v1087 = vadd.f32 %v1081, %v1084
    %v1088 = vadd.f32 %v1082, %v1084
    %v1089 = vmax.f32 %v1085, 0.0
    %v1090 = vmax.f32 %v1086, 0.0
    %v1091 = vmax.f32 %v1087, 0.0
    %v1092 = vmax.f32 %v1088, 0.0
    %v1101 = vunpack.c.l.b16 %v914
    %v1102 = vunpack.c.l.b16 %v915
    %v1103 = vunpack.c.l.b16 %v916
    %v1104 = vunpack.c.l.b16 %v917
    %v1105 = vunpack.c.l.b16 %v918
    %v1106 = vunpack.c.l.b16 %v919
    %v1107 = vunpack.c.l.b16 %v920
    %v1108 = vunpack.c.l.b16 %v921
    %v1109 = vpack.c.b16 %v1102, %v1101
    %v1110 = vpack.c.b16 %v1104, %v1103
    %v1111 = vpack.c.b16 %v1106, %v1105
    %v1112 = vpack.c.b16 %v1108, %v1107
    %1117 = vmatpush.bf16.msra.mxu0 0
    %1118 = vmatpush.bf16.msra.mxu0 0
    %1119 = vmatpush.bf16.msra.mxu0 0
    %1120 = vmatpush.bf16.msra.mxu0 0
    %1121 = vmatpush.bf16.msra.mxu0 %v1112
    %1122 = vmatpush.bf16.msra.mxu0 %v1111
    %1123 = vmatpush.bf16.msra.mxu0 %v1110
    %1124 = vmatpush.bf16.msra.mxu0 %v1109
    %1125 = vmatmul.bf16.gmra.mxu0 %v1000
    %v1126 = vpop.f32.mrf.mxu0
    %v1127 = vadd.f32 0.0, %v1126
    %v1128 = vpop.f32.mrf.mxu0
    %v1129 = vadd.f32 0.0, %v1128
    %1130 = vmatmul.bf16.gmra.mxu0 %v1003
    %v1131 = vpop.f32.mrf.mxu0
    %v1132 = vadd.f32 0.0, %v1131
    %v1133 = vpop.f32.mrf.mxu0
    %v1134 = vadd.f32 0.0, %v1133
    %1135 = vdwg.mxu0
    %v1136 = vpack.c.bf16 %v1089, 0.0
    %v1137 = vpack.c.bf16 %v1091, %v1090
    %v1154 = vunpack.c.l.b16 %v866
    %v1155 = vunpack.c.l.b16 %v867
    %v1156 = vunpack.c.l.b16 %v868
    %v1157 = vunpack.c.l.b16 %v869
    %v1158 = vunpack.c.l.b16 %v870
    %v1159 = vunpack.c.l.b16 %v871
    %v1160 = vunpack.c.l.b16 %v872
    %v1161 = vunpack.c.l.b16 %v873
    %v1162 = vunpack.c.l.b16 %v874
    %v1163 = vunpack.c.l.b16 %v875
    %v1164 = vunpack.c.l.b16 %v876
    %v1165 = vunpack.c.l.b16 %v877
    %v1166 = vunpack.c.l.b16 %v878
    %v1167 = vunpack.c.l.b16 %v879
    %v1168 = vunpack.c.l.b16 %v880
    %v1169 = vunpack.c.l.b16 %v881
    %v1170 = vpack.c.b16 %v1155, %v1154
    %v1171 = vpack.c.b16 %v1157, %v1156
    %v1172 = vpack.c.b16 %v1159, %v1158
    %v1173 = vpack.c.b16 %v1161, %v1160
    %v1174 = vpack.c.b16 %v1163, %v1162
    %v1175 = vpack.c.b16 %v1165, %v1164
    %v1176 = vpack.c.b16 %v1167, %v1166
    %v1177 = vpack.c.b16 %v1169, %v1168
    %1186 = vmatpush.bf16.msra.mxu0 %v1177
    %1187 = vmatpush.bf16.msra.mxu0 %v1176
    %1188 = vmatpush.bf16.msra.mxu0 %v1175
    %1189 = vmatpush.bf16.msra.mxu0 %v1174
    %1190 = vmatpush.bf16.msra.mxu0 %v1173
    %1191 = vmatpush.bf16.msra.mxu0 %v1172
    %1192 = vmatpush.bf16.msra.mxu0 %v1171
    %1193 = vmatpush.bf16.msra.mxu0 %v1170
    %1194 = vmatmul.bf16.gmra.mxu0 %v1136
    %v1195 = vpop.f32.mrf.mxu0
    %v1196 = vadd.f32 0.0, %v1195
    %v1197 = vpop.f32.mrf.mxu0
    %v1198 = vadd.f32 0.0, %v1197
    %1199 = vmatmul.bf16.gmra.mxu0 %v1137
    %v1200 = vpop.f32.mrf.mxu0
    %v1201 = vadd.f32 0.0, %v1200
    %v1202 = vpop.f32.mrf.mxu0
    %v1203 = vadd.f32 0.0, %v1202
    %1204 = vdwg.mxu0
    %v1205 = vpack.c.bf16 %v1090, %v1089
    %v1206 = vpack.c.bf16 %v1092, %v1091
    %v1223 = vunpack.c.l.b16 %v882
    %v1224 = vunpack.c.l.b16 %v883
    %v1225 = vunpack.c.l.b16 %v884
    %v1226 = vunpack.c.l.b16 %v885
    %v1227 = vunpack.c.l.b16 %v886
    %v1228 = vunpack.c.l.b16 %v887
    %v1229 = vunpack.c.l.b16 %v888
    %v1230 = vunpack.c.l.b16 %v889
    %v1231 = vunpack.c.l.b16 %v890
    %v1232 = vunpack.c.l.b16 %v891
    %v1233 = vunpack.c.l.b16 %v892
    %v1234 = vunpack.c.l.b16 %v893
    %v1235 = vunpack.c.l.b16 %v894
    %v1236 = vunpack.c.l.b16 %v895
    %v1237 = vunpack.c.l.b16 %v896
    %v1238 = vunpack.c.l.b16 %v897
    %v1239 = vpack.c.b16 %v1224, %v1223
    %v1240 = vpack.c.b16 %v1226, %v1225
    %v1241 = vpack.c.b16 %v1228, %v1227
    %v1242 = vpack.c.b16 %v1230, %v1229
    %v1243 = vpack.c.b16 %v1232, %v1231
    %v1244 = vpack.c.b16 %v1234, %v1233
    %v1245 = vpack.c.b16 %v1236, %v1235
    %v1246 = vpack.c.b16 %v1238, %v1237
    %1255 = vmatpush.bf16.msra.mxu0 %v1246
    %1256 = vmatpush.bf16.msra.mxu0 %v1245
    %1257 = vmatpush.bf16.msra.mxu0 %v1244
    %1258 = vmatpush.bf16.msra.mxu0 %v1243
    %1259 = vmatpush.bf16.msra.mxu0 %v1242
    %1260 = vmatpush.bf16.msra.mxu0 %v1241
    %1261 = vmatpush.bf16.msra.mxu0 %v1240
    %1262 = vmatpush.bf16.msra.mxu0 %v1239
    %1263 = vmatmul.bf16.gmra.mxu0 %v1205
    %v1264 = vpop.f32.mrf.mxu0
    %v1265 = vadd.f32 0.0, %v1264
    %v1266 = vpop.f32.mrf.mxu0
    %v1267 = vadd.f32 0.0, %v1266
    %1268 = vmatmul.bf16.gmra.mxu0 %v1206
    %v1269 = vpop.f32.mrf.mxu0
    %v1270 = vadd.f32 0.0, %v1269
    %v1271 = vpop.f32.mrf.mxu0
    %v1272 = vadd.f32 0.0, %v1271
    %1273 = vdwg.mxu0
    %v1274 = vadd.f32 %v1196, %v1265
    %v1275 = vadd.f32 %v1198, %v1267
    %v1276 = vadd.f32 %v1201, %v1270
    %v1277 = vadd.f32 %v1203, %v1272
    %v1278 = vpack.c.bf16 0.0, %v1092
    %v1295 = vunpack.c.l.b16 %v898
    %v1296 = vunpack.c.l.b16 %v899
    %v1297 = vunpack.c.l.b16 %v900
    %v1298 = vunpack.c.l.b16 %v901
    %v1299 = vunpack.c.l.b16 %v902
    %v1300 = vunpack.c.l.b16 %v903
    %v1301 = vunpack.c.l.b16 %v904
    %v1302 = vunpack.c.l.b16 %v905
    %v1303 = vunpack.c.l.b16 %v906
    %v1304 = vunpack.c.l.b16 %v907
    %v1305 = vunpack.c.l.b16 %v908
    %v1306 = vunpack.c.l.b16 %v909
    %v1307 = vunpack.c.l.b16 %v910
    %v1308 = vunpack.c.l.b16 %v911
    %v1309 = vunpack.c.l.b16 %v912
    %v1310 = vunpack.c.l.b16 %v913
    %v1311 = vpack.c.b16 %v1296, %v1295
    %v1312 = vpack.c.b16 %v1298, %v1297
    %v1313 = vpack.c.b16 %v1300, %v1299
    %v1314 = vpack.c.b16 %v1302, %v1301
    %v1315 = vpack.c.b16 %v1304, %v1303
    %v1316 = vpack.c.b16 %v1306, %v1305
    %v1317 = vpack.c.b16 %v1308, %v1307
    %v1318 = vpack.c.b16 %v1310, %v1309
    %1327 = vmatpush.bf16.msra.mxu0 %v1318
    %1328 = vmatpush.bf16.msra.mxu0 %v1317
    %1329 = vmatpush.bf16.msra.mxu0 %v1316
    %1330 = vmatpush.bf16.msra.mxu0 %v1315
    %1331 = vmatpush.bf16.msra.mxu0 %v1314
    %1332 = vmatpush.bf16.msra.mxu0 %v1313
    %1333 = vmatpush.bf16.msra.mxu0 %v1312
    %1334 = vmatpush.bf16.msra.mxu0 %v1311
    %1335 = vmatmul.bf16.gmra.mxu0 %v1137
    %v1336 = vpop.f32.mrf.mxu0
    %v1337 = vadd.f32 0.0, %v1336
    %v1338 = vpop.f32.mrf.mxu0
    %v1339 = vadd.f32 0.0, %v1338
    %1340 = vmatmul.bf16.gmra.mxu0 %v1278
    %v1341 = vpop.f32.mrf.mxu0
    %v1342 = vadd.f32 0.0, %v1341
    %v1343 = vpop.f32.mrf.mxu0
    %v1344 = vadd.f32 0.0, %v1343
    %1345 = vdwg.mxu0
    %v1346 = vadd.f32 %v1274, %v1337
    %v1347 = vadd.f32 %v1275, %v1339
    %v1348 = vadd.f32 %v1276, %v1342
    %v1349 = vadd.f32 %v1277, %v1344
    %v1350 = vld [vmem:[%s6 + $0x1] sm:$0x1]
    %v1351 = vadd.f32 %v1346, %v1127
    %v1352 = vadd.f32 %v1347, %v1129
    %v1353 = vadd.f32 %v1348, %v1132
    %v1354 = vadd.f32 %v1349, %v1134
    %v1355 = vperm.slane %v1350, 0
    %v1356 = vadd.f32 %v1351, %v1355
    %v1357 = vadd.f32 %v1352, %v1355
    %v1358 = vadd.f32 %v1353, %v1355
    %v1359 = vadd.f32 %v1354, %v1355
    %v1360 = vmax.f32 %v1356, 0.0
    %v1361 = vmax.f32 %v1357, 0.0
    %v1362 = vmax.f32 %v1358, 0.0
    %v1363 = vmax.f32 %v1359, 0.0
    %v1364 = vld [vmem:[#allocation4] sm:$0xff]
    %v1365 = vld [vmem:[#allocation4 + $0x8] sm:$0xff]
    %v1366 = vld [vmem:[#allocation4 + $0x10] sm:$0xff]
    %v1367 = vld [vmem:[#allocation4 + $0x18] sm:$0xff]
    %v1368 = vld [vmem:[#allocation4 + $0x20] sm:$0xff]
    %v1369 = vld [vmem:[#allocation4 + $0x28] sm:$0xff]
    %v1370 = vld [vmem:[#allocation4 + $0x30] sm:$0xff]
    %v1371 = vld [vmem:[#allocation4 + $0x38] sm:$0xff]
    %v1372 = vld [vmem:[#allocation4 + $0x40] sm:$0xff]
    %v1373 = vld [vmem:[#allocation4 + $0x48] sm:$0xff]
    %v1374 = vld [vmem:[#allocation4 + $0x50] sm:$0xff]
    %v1375 = vld [vmem:[#allocation4 + $0x58] sm:$0xff]
    %v1376 = vld [vmem:[#allocation4 + $0x60] sm:$0xff]
    %v1377 = vld [vmem:[#allocation4 + $0x68] sm:$0xff]
    %v1378 = vld [vmem:[#allocation4 + $0x70] sm:$0xff]
    %v1379 = vld [vmem:[#allocation4 + $0x78] sm:$0xff]
    %v1380 = vld [vmem:[#allocation4 + $0x80] sm:$0xff]
    %v1381 = vld [vmem:[#allocation4 + $0x88] sm:$0xff]
    %v1382 = vld [vmem:[#allocation4 + $0x90] sm:$0xff]
    %v1383 = vld [vmem:[#allocation4 + $0x98] sm:$0xff]
    %v1384 = vld [vmem:[#allocation4 + $0xa0] sm:$0xff]
    %v1385 = vld [vmem:[#allocation4 + $0xa8] sm:$0xff]
    %v1386 = vld [vmem:[#allocation4 + $0xb0] sm:$0xff]
    %v1387 = vld [vmem:[#allocation4 + $0xb8] sm:$0xff]
    %v1388 = vld [vmem:[#allocation4 + $0xc0] sm:$0xff]
    %v1389 = vld [vmem:[#allocation4 + $0xc8] sm:$0xff]
    %v1390 = vld [vmem:[#allocation4 + $0xd0] sm:$0xff]
    %v1391 = vld [vmem:[#allocation4 + $0xd8] sm:$0xff]
    %v1392 = vld [vmem:[#allocation4 + $0xe0] sm:$0xff]
    %v1393 = vld [vmem:[#allocation4 + $0xe8] sm:$0xff]
    %v1394 = vld [vmem:[#allocation4 + $0xf0] sm:$0xff]
    %v1395 = vld [vmem:[#allocation4 + $0xf8] sm:$0xff]
    %v1396 = vld [vmem:[#allocation4 + $0x100] sm:$0xff]
    %v1397 = vld [vmem:[#allocation4 + $0x108] sm:$0xff]
    %v1398 = vld [vmem:[#allocation4 + $0x110] sm:$0xff]
    %v1399 = vld [vmem:[#allocation4 + $0x118] sm:$0xff]
    %v1400 = vld [vmem:[#allocation4 + $0x120] sm:$0xff]
    %v1401 = vld [vmem:[#allocation4 + $0x128] sm:$0xff]
    %v1402 = vld [vmem:[#allocation4 + $0x130] sm:$0xff]
    %v1403 = vld [vmem:[#allocation4 + $0x138] sm:$0xff]
    %v1404 = vld [vmem:[#allocation4 + $0x140] sm:$0xff]
    %v1405 = vld [vmem:[#allocation4 + $0x148] sm:$0xff]
    %v1406 = vld [vmem:[#allocation4 + $0x150] sm:$0xff]
    %v1407 = vld [vmem:[#allocation4 + $0x158] sm:$0xff]
    %v1408 = vld [vmem:[#allocation4 + $0x160] sm:$0xff]
    %v1409 = vld [vmem:[#allocation4 + $0x168] sm:$0xff]
    %v1410 = vld [vmem:[#allocation4 + $0x170] sm:$0xff]
    %v1411 = vld [vmem:[#allocation4 + $0x178] sm:$0xff]
    %v1412 = vld [vmem:[#allocation4 + $0x180] sm:$0xff]
    %v1413 = vld [vmem:[#allocation4 + $0x188] sm:$0xff]
    %v1414 = vld [vmem:[#allocation4 + $0x190] sm:$0xff]
    %v1415 = vld [vmem:[#allocation4 + $0x198] sm:$0xff]
    %v1416 = vld [vmem:[#allocation4 + $0x1a0] sm:$0xff]
    %v1417 = vld [vmem:[#allocation4 + $0x1a8] sm:$0xff]
    %v1418 = vld [vmem:[#allocation4 + $0x1b0] sm:$0xff]
    %v1419 = vld [vmem:[#allocation4 + $0x1b8] sm:$0xff]
    %v1420 = vld [vmem:[#allocation4 + $0x1c0] sm:$0xff]
    %v1421 = vld [vmem:[#allocation4 + $0x1c8] sm:$0xff]
    %v1422 = vld [vmem:[#allocation4 + $0x1d0] sm:$0xff]
    %v1423 = vld [vmem:[#allocation4 + $0x1d8] sm:$0xff]
    %v1424 = vld [vmem:[#allocation4 + $0x1e0] sm:$0xff]
    %v1425 = vld [vmem:[#allocation4 + $0x1e8] sm:$0xff]
    %v1426 = vld [vmem:[#allocation4 + $0x1f0] sm:$0xff]
    %v1427 = vld [vmem:[#allocation4 + $0x1f8] sm:$0xff]
    %v1428 = vld [vmem:[#allocation4 + $0x200] sm:$0xff]
    %v1429 = vld [vmem:[#allocation4 + $0x208] sm:$0xff]
    %v1430 = vld [vmem:[#allocation4 + $0x210] sm:$0xff]
    %v1431 = vld [vmem:[#allocation4 + $0x218] sm:$0xff]
    %v1432 = vld [vmem:[#allocation4 + $0x220] sm:$0xff]
    %v1433 = vld [vmem:[#allocation4 + $0x228] sm:$0xff]
    %v1434 = vld [vmem:[#allocation4 + $0x230] sm:$0xff]
    %v1435 = vld [vmem:[#allocation4 + $0x238] sm:$0xff]
    %v1436 = vld [vmem:[#allocation4 + $0x240] sm:$0xff]
    %v1437 = vld [vmem:[#allocation4 + $0x248] sm:$0xff]
    %v1438 = vld [vmem:[#allocation4 + $0x250] sm:$0xff]
    %v1439 = vld [vmem:[#allocation4 + $0x258] sm:$0xff]
    %v1440 = vld [vmem:[#allocation4 + $0x260] sm:$0xff]
    %v1441 = vld [vmem:[#allocation4 + $0x268] sm:$0xff]
    %v1442 = vld [vmem:[#allocation4 + $0x270] sm:$0xff]
    %v1443 = vld [vmem:[#allocation4 + $0x278] sm:$0xff]
    %v1444 = vld [vmem:[#allocation4 + $0x280] sm:$0xff]
    %v1445 = vld [vmem:[#allocation4 + $0x288] sm:$0xff]
    %v1446 = vld [vmem:[#allocation4 + $0x290] sm:$0xff]
    %v1447 = vld [vmem:[#allocation4 + $0x298] sm:$0xff]
    %v1448 = vld [vmem:[#allocation4 + $0x2a0] sm:$0xff]
    %v1449 = vld [vmem:[#allocation4 + $0x2a8] sm:$0xff]
    %v1450 = vld [vmem:[#allocation4 + $0x2b0] sm:$0xff]
    %v1451 = vld [vmem:[#allocation4 + $0x2b8] sm:$0xff]
    %v1452 = vld [vmem:[#allocation4 + $0x2c0] sm:$0xff]
    %v1453 = vld [vmem:[#allocation4 + $0x2c8] sm:$0xff]
    %v1454 = vld [vmem:[#allocation4 + $0x2d0] sm:$0xff]
    %v1455 = vld [vmem:[#allocation4 + $0x2d8] sm:$0xff]
    %v1456 = vld [vmem:[#allocation4 + $0x2e0] sm:$0xff]
    %v1457 = vld [vmem:[#allocation4 + $0x2e8] sm:$0xff]
    %v1458 = vld [vmem:[#allocation4 + $0x2f0] sm:$0xff]
    %v1459 = vld [vmem:[#allocation4 + $0x2f8] sm:$0xff]
    %v1460 = vld [vmem:[#allocation4 + $0x300] sm:$0xff]
    %v1461 = vld [vmem:[#allocation4 + $0x308] sm:$0xff]
    %v1462 = vld [vmem:[#allocation4 + $0x310] sm:$0xff]
    %v1463 = vld [vmem:[#allocation4 + $0x318] sm:$0xff]
    %v1464 = vld [vmem:[#allocation4 + $0x320] sm:$0xff]
    %v1465 = vld [vmem:[#allocation4 + $0x328] sm:$0xff]
    %v1466 = vld [vmem:[#allocation4 + $0x330] sm:$0xff]
    %v1467 = vld [vmem:[#allocation4 + $0x338] sm:$0xff]
    %v1468 = vld [vmem:[#allocation4 + $0x340] sm:$0xff]
    %v1469 = vld [vmem:[#allocation4 + $0x348] sm:$0xff]
    %v1470 = vld [vmem:[#allocation4 + $0x350] sm:$0xff]
    %v1471 = vld [vmem:[#allocation4 + $0x358] sm:$0xff]
    %v1472 = vld [vmem:[#allocation4 + $0x360] sm:$0xff]
    %v1473 = vld [vmem:[#allocation4 + $0x368] sm:$0xff]
    %v1474 = vld [vmem:[#allocation4 + $0x370] sm:$0xff]
    %v1475 = vld [vmem:[#allocation4 + $0x378] sm:$0xff]
    %v1476 = vld [vmem:[#allocation4 + $0x380] sm:$0xff]
    %v1477 = vld [vmem:[#allocation4 + $0x388] sm:$0xff]
    %v1478 = vld [vmem:[#allocation4 + $0x390] sm:$0xff]
    %v1479 = vld [vmem:[#allocation4 + $0x398] sm:$0xff]
    %v1480 = vld [vmem:[#allocation4 + $0x3a0] sm:$0xff]
    %v1481 = vld [vmem:[#allocation4 + $0x3a8] sm:$0xff]
    %v1482 = vld [vmem:[#allocation4 + $0x3b0] sm:$0xff]
    %v1483 = vld [vmem:[#allocation4 + $0x3b8] sm:$0xff]
    %v1484 = vld [vmem:[#allocation4 + $0x3c0] sm:$0xff]
    %v1485 = vld [vmem:[#allocation4 + $0x3c8] sm:$0xff]
    %v1486 = vld [vmem:[#allocation4 + $0x3d0] sm:$0xff]
    %v1487 = vld [vmem:[#allocation4 + $0x3d8] sm:$0xff]
    %v1488 = vld [vmem:[#allocation4 + $0x3e0] sm:$0xff]
    %v1489 = vld [vmem:[#allocation4 + $0x3e8] sm:$0xff]
    %v1490 = vld [vmem:[#allocation4 + $0x3f0] sm:$0xff]
    %v1491 = vld [vmem:[#allocation4 + $0x3f8] sm:$0xff]
    %v1492 = vld [vmem:[#allocation4 + $0x400] sm:$0xff]
    %v1493 = vld [vmem:[#allocation4 + $0x408] sm:$0xff]
    %v1494 = vld [vmem:[#allocation4 + $0x410] sm:$0xff]
    %v1495 = vld [vmem:[#allocation4 + $0x418] sm:$0xff]
    %v1496 = vld [vmem:[#allocation4 + $0x420] sm:$0xff]
    %v1497 = vld [vmem:[#allocation4 + $0x428] sm:$0xff]
    %v1498 = vld [vmem:[#allocation4 + $0x430] sm:$0xff]
    %v1499 = vld [vmem:[#allocation4 + $0x438] sm:$0xff]
    %v1500 = vld [vmem:[#allocation4 + $0x440] sm:$0xff]
    %v1501 = vld [vmem:[#allocation4 + $0x448] sm:$0xff]
    %v1502 = vld [vmem:[#allocation4 + $0x450] sm:$0xff]
    %v1503 = vld [vmem:[#allocation4 + $0x458] sm:$0xff]
    %v1504 = vld [vmem:[#allocation4 + $0x460] sm:$0xff]
    %v1505 = vld [vmem:[#allocation4 + $0x468] sm:$0xff]
    %v1506 = vld [vmem:[#allocation4 + $0x470] sm:$0xff]
    %v1507 = vld [vmem:[#allocation4 + $0x478] sm:$0xff]
    %v1508 = vld [vmem:[#allocation4 + $0x480] sm:$0xff]
    %v1509 = vld [vmem:[#allocation4 + $0x488] sm:$0xff]
    %v1510 = vld [vmem:[#allocation4 + $0x490] sm:$0xff]
    %v1511 = vld [vmem:[#allocation4 + $0x498] sm:$0xff]
    %v1512 = vld [vmem:[#allocation4 + $0x4a0] sm:$0xff]
    %v1513 = vld [vmem:[#allocation4 + $0x4a8] sm:$0xff]
    %v1514 = vld [vmem:[#allocation4 + $0x4b0] sm:$0xff]
    %v1515 = vld [vmem:[#allocation4 + $0x4b8] sm:$0xff]
    %v1516 = vld [vmem:[#allocation4 + $0x4c0] sm:$0xff]
    %v1517 = vld [vmem:[#allocation4 + $0x4c8] sm:$0xff]
    %v1518 = vld [vmem:[#allocation4 + $0x4d0] sm:$0xff]
    %v1519 = vld [vmem:[#allocation4 + $0x4d8] sm:$0xff]
    %v1520 = vld [vmem:[#allocation4 + $0x4e0] sm:$0xff]
    %v1521 = vld [vmem:[#allocation4 + $0x4e8] sm:$0xff]
    %v1522 = vld [vmem:[#allocation4 + $0x4f0] sm:$0xff]
    %v1523 = vld [vmem:[#allocation4 + $0x4f8] sm:$0xff]
    %v1524 = vpack.c.bf16 %v1361, 0.0
    %v1541 = vunpack.c.l.b16 %v1364
    %v1542 = vunpack.c.h.b16 %v1364
    %v1543 = vunpack.c.l.b16 %v1365
    %v1544 = vunpack.c.h.b16 %v1365
    %v1545 = vunpack.c.l.b16 %v1366
    %v1546 = vunpack.c.h.b16 %v1366
    %v1547 = vunpack.c.l.b16 %v1367
    %v1548 = vunpack.c.h.b16 %v1367
    %v1549 = vunpack.c.l.b16 %v1368
    %v1550 = vunpack.c.h.b16 %v1368
    %v1551 = vunpack.c.l.b16 %v1369
    %v1552 = vunpack.c.h.b16 %v1369
    %v1553 = vunpack.c.l.b16 %v1370
    %v1554 = vunpack.c.h.b16 %v1370
    %v1555 = vunpack.c.l.b16 %v1371
    %v1556 = vunpack.c.h.b16 %v1371
    %v1557 = vunpack.c.l.b16 %v1372
    %v1558 = vunpack.c.h.b16 %v1372
    %v1559 = vunpack.c.l.b16 %v1373
    %v1560 = vunpack.c.h.b16 %v1373
    %v1561 = vunpack.c.l.b16 %v1374
    %v1562 = vunpack.c.h.b16 %v1374
    %v1563 = vunpack.c.l.b16 %v1375
    %v1564 = vunpack.c.h.b16 %v1375
    %v1565 = vunpack.c.l.b16 %v1376
    %v1566 = vunpack.c.h.b16 %v1376
    %v1567 = vunpack.c.l.b16 %v1377
    %v1568 = vunpack.c.h.b16 %v1377
    %v1569 = vunpack.c.l.b16 %v1378
    %v1570 = vunpack.c.h.b16 %v1378
    %v1571 = vunpack.c.l.b16 %v1379
    %v1572 = vunpack.c.h.b16 %v1379
    %v1573 = vpack.c.b16 %v1543, %v1541
    %v1574 = vpack.c.b16 %v1544, %v1542
    %v1575 = vpack.c.b16 %v1547, %v1545
    %v1576 = vpack.c.b16 %v1548, %v1546
    %v1577 = vpack.c.b16 %v1551, %v1549
    %v1578 = vpack.c.b16 %v1552, %v1550
    %v1579 = vpack.c.b16 %v1555, %v1553
    %v1580 = vpack.c.b16 %v1556, %v1554
    %v1581 = vpack.c.b16 %v1559, %v1557
    %v1582 = vpack.c.b16 %v1560, %v1558
    %v1583 = vpack.c.b16 %v1563, %v1561
    %v1584 = vpack.c.b16 %v1564, %v1562
    %v1585 = vpack.c.b16 %v1567, %v1565
    %v1586 = vpack.c.b16 %v1568, %v1566
    %v1587 = vpack.c.b16 %v1571, %v1569
    %v1588 = vpack.c.b16 %v1572, %v1570
    %1605 = vmatpush.bf16.msra.mxu0 %v1587
    %1606 = vmatpush.bf16.msra.mxu0 %v1585
    %1607 = vmatpush.bf16.msra.mxu0 %v1583
    %1608 = vmatpush.bf16.msra.mxu0 %v1581
    %1609 = vmatpush.bf16.msra.mxu0 %v1579
    %1610 = vmatpush.bf16.msra.mxu0 %v1577
    %1611 = vmatpush.bf16.msra.mxu0 %v1575
    %1612 = vmatpush.bf16.msra.mxu0 %v1573
    %1613 = vmatmul.bf16.gmra.mxu0 %v1524
    %v1614 = vpop.f32.mrf.mxu0
    %v1615 = vadd.f32 0.0, %v1614
    %v1616 = vpop.f32.mrf.mxu0
    %v1617 = vadd.f32 0.0, %v1616
    %1618 = vdwg.mxu0
    %1619 = vmatpush.bf16.msra.mxu0 %v1588
    %1620 = vmatpush.bf16.msra.mxu0 %v1586
    %1621 = vmatpush.bf16.msra.mxu0 %v1584
    %1622 = vmatpush.bf16.msra.mxu0 %v1582
    %1623 = vmatpush.bf16.msra.mxu0 %v1580
    %1624 = vmatpush.bf16.msra.mxu0 %v1578
    %1625 = vmatpush.bf16.msra.mxu0 %v1576
    %1626 = vmatpush.bf16.msra.mxu0 %v1574
    %1627 = vmatmul.bf16.gmra.mxu0 %v1524
    %v1628 = vpop.f32.mrf.mxu0
    %v1629 = vadd.f32 0.0, %v1628
    %v1630 = vpop.f32.mrf.mxu0
    %v1631 = vadd.f32 0.0, %v1630
    %1632 = vdwg.mxu0
    %v1633 = vpack.c.bf16 %v1362, %v1360
    %v1650 = vunpack.c.l.b16 %v1380
    %v1651 = vunpack.c.h.b16 %v1380
    %v1652 = vunpack.c.l.b16 %v1381
    %v1653 = vunpack.c.h.b16 %v1381
    %v1654 = vunpack.c.l.b16 %v1382
    %v1655 = vunpack.c.h.b16 %v1382
    %v1656 = vunpack.c.l.b16 %v1383
    %v1657 = vunpack.c.h.b16 %v1383
    %v1658 = vunpack.c.l.b16 %v1384
    %v1659 = vunpack.c.h.b16 %v1384
    %v1660 = vunpack.c.l.b16 %v1385
    %v1661 = vunpack.c.h.b16 %v1385
    %v1662 = vunpack.c.l.b16 %v1386
    %v1663 = vunpack.c.h.b16 %v1386
    %v1664 = vunpack.c.l.b16 %v1387
    %v1665 = vunpack.c.h.b16 %v1387
    %v1666 = vunpack.c.l.b16 %v1388
    %v1667 = vunpack.c.h.b16 %v1388
    %v1668 = vunpack.c.l.b16 %v1389
    %v1669 = vunpack.c.h.b16 %v1389
    %v1670 = vunpack.c.l.b16 %v1390
    %v1671 = vunpack.c.h.b16 %v1390
    %v1672 = vunpack.c.l.b16 %v1391
    %v1673 = vunpack.c.h.b16 %v1391
    %v1674 = vunpack.c.l.b16 %v1392
    %v1675 = vunpack.c.h.b16 %v1392
    %v1676 = vunpack.c.l.b16 %v1393
    %v1677 = vunpack.c.h.b16 %v1393
    %v1678 = vunpack.c.l.b16 %v1394
    %v1679 = vunpack.c.h.b16 %v1394
    %v1680 = vunpack.c.l.b16 %v1395
    %v1681 = vunpack.c.h.b16 %v1395
    %v1682 = vpack.c.b16 %v1652, %v1650
    %v1683 = vpack.c.b16 %v1653, %v1651
    %v1684 = vpack.c.b16 %v1656, %v1654
    %v1685 = vpack.c.b16 %v1657, %v1655
    %v1686 = vpack.c.b16 %v1660, %v1658
    %v1687 = vpack.c.b16 %v1661, %v1659
    %v1688 = vpack.c.b16 %v1664, %v1662
    %v1689 = vpack.c.b16 %v1665, %v1663
    %v1690 = vpack.c.b16 %v1668, %v1666
    %v1691 = vpack.c.b16 %v1669, %v1667
    %v1692 = vpack.c.b16 %v1672, %v1670
    %v1693 = vpack.c.b16 %v1673, %v1671
    %v1694 = vpack.c.b16 %v1676, %v1674
    %v1695 = vpack.c.b16 %v1677, %v1675
    %v1696 = vpack.c.b16 %v1680, %v1678
    %v1697 = vpack.c.b16 %v1681, %v1679
    %1714 = vmatpush.bf16.msra.mxu0 %v1696
    %1715 = vmatpush.bf16.msra.mxu0 %v1694
    %1716 = vmatpush.bf16.msra.mxu0 %v1692
    %1717 = vmatpush.bf16.msra.mxu0 %v1690
    %1718 = vmatpush.bf16.msra.mxu0 %v1688
    %1719 = vmatpush.bf16.msra.mxu0 %v1686
    %1720 = vmatpush.bf16.msra.mxu0 %v1684
    %1721 = vmatpush.bf16.msra.mxu0 %v1682
    %1722 = vmatmul.bf16.gmra.mxu0 %v1633
    %v1723 = vpop.f32.mrf.mxu0
    %v1724 = vadd.f32 0.0, %v1723
    %v1725 = vpop.f32.mrf.mxu0
    %v1726 = vadd.f32 0.0, %v1725
    %1727 = vdwg.mxu0
    %1728 = vmatpush.bf16.msra.mxu0 %v1697
    %1729 = vmatpush.bf16.msra.mxu0 %v1695
    %1730 = vmatpush.bf16.msra.mxu0 %v1693
    %1731 = vmatpush.bf16.msra.mxu0 %v1691
    %1732 = vmatpush.bf16.msra.mxu0 %v1689
    %1733 = vmatpush.bf16.msra.mxu0 %v1687
    %1734 = vmatpush.bf16.msra.mxu0 %v1685
    %1735 = vmatpush.bf16.msra.mxu0 %v1683
    %1736 = vmatmul.bf16.gmra.mxu0 %v1633
    %v1737 = vpop.f32.mrf.mxu0
    %v1738 = vadd.f32 0.0, %v1737
    %v1739 = vpop.f32.mrf.mxu0
    %v1740 = vadd.f32 0.0, %v1739
    %1741 = vdwg.mxu0
    %v1742 = vadd.f32 %v1615, %v1724
    %v1743 = vadd.f32 %v1629, %v1738
    %v1744 = vadd.f32 %v1617, %v1726
    %v1745 = vadd.f32 %v1631, %v1740
    %v1746 = vpack.c.bf16 %v1363, %v1361
    %v1763 = vunpack.c.l.b16 %v1396
    %v1764 = vunpack.c.h.b16 %v1396
    %v1765 = vunpack.c.l.b16 %v1397
    %v1766 = vunpack.c.h.b16 %v1397
    %v1767 = vunpack.c.l.b16 %v1398
    %v1768 = vunpack.c.h.b16 %v1398
    %v1769 = vunpack.c.l.b16 %v1399
    %v1770 = vunpack.c.h.b16 %v1399
    %v1771 = vunpack.c.l.b16 %v1400
    %v1772 = vunpack.c.h.b16 %v1400
    %v1773 = vunpack.c.l.b16 %v1401
    %v1774 = vunpack.c.h.b16 %v1401
    %v1775 = vunpack.c.l.b16 %v1402
    %v1776 = vunpack.c.h.b16 %v1402
    %v1777 = vunpack.c.l.b16 %v1403
    %v1778 = vunpack.c.h.b16 %v1403
    %v1779 = vunpack.c.l.b16 %v1404
    %v1780 = vunpack.c.h.b16 %v1404
    %v1781 = vunpack.c.l.b16 %v1405
    %v1782 = vunpack.c.h.b16 %v1405
    %v1783 = vunpack.c.l.b16 %v1406
    %v1784 = vunpack.c.h.b16 %v1406
    %v1785 = vunpack.c.l.b16 %v1407
    %v1786 = vunpack.c.h.b16 %v1407
    %v1787 = vunpack.c.l.b16 %v1408
    %v1788 = vunpack.c.h.b16 %v1408
    %v1789 = vunpack.c.l.b16 %v1409
    %v1790 = vunpack.c.h.b16 %v1409
    %v1791 = vunpack.c.l.b16 %v1410
    %v1792 = vunpack.c.h.b16 %v1410
    %v1793 = vunpack.c.l.b16 %v1411
    %v1794 = vunpack.c.h.b16 %v1411
    %v1795 = vpack.c.b16 %v1765, %v1763
    %v1796 = vpack.c.b16 %v1766, %v1764
    %v1797 = vpack.c.b16 %v1769, %v1767
    %v1798 = vpack.c.b16 %v1770, %v1768
    %v1799 = vpack.c.b16 %v1773, %v1771
    %v1800 = vpack.c.b16 %v1774, %v1772
    %v1801 = vpack.c.b16 %v1777, %v1775
    %v1802 = vpack.c.b16 %v1778, %v1776
    %v1803 = vpack.c.b16 %v1781, %v1779
    %v1804 = vpack.c.b16 %v1782, %v1780
    %v1805 = vpack.c.b16 %v1785, %v1783
    %v1806 = vpack.c.b16 %v1786, %v1784
    %v1807 = vpack.c.b16 %v1789, %v1787
    %v1808 = vpack.c.b16 %v1790, %v1788
    %v1809 = vpack.c.b16 %v1793, %v1791
    %v1810 = vpack.c.b16 %v1794, %v1792
    %1827 = vmatpush.bf16.msra.mxu0 %v1809
    %1828 = vmatpush.bf16.msra.mxu0 %v1807
    %1829 = vmatpush.bf16.msra.mxu0 %v1805
    %1830 = vmatpush.bf16.msra.mxu0 %v1803
    %1831 = vmatpush.bf16.msra.mxu0 %v1801
    %1832 = vmatpush.bf16.msra.mxu0 %v1799
    %1833 = vmatpush.bf16.msra.mxu0 %v1797
    %1834 = vmatpush.bf16.msra.mxu0 %v1795
    %1835 = vmatmul.bf16.gmra.mxu0 %v1746
    %v1836 = vpop.f32.mrf.mxu0
    %v1837 = vadd.f32 0.0, %v1836
    %v1838 = vpop.f32.mrf.mxu0
    %v1839 = vadd.f32 0.0, %v1838
    %1840 = vdwg.mxu0
    %1841 = vmatpush.bf16.msra.mxu0 %v1810
    %1842 = vmatpush.bf16.msra.mxu0 %v1808
    %1843 = vmatpush.bf16.msra.mxu0 %v1806
    %1844 = vmatpush.bf16.msra.mxu0 %v1804
    %1845 = vmatpush.bf16.msra.mxu0 %v1802
    %1846 = vmatpush.bf16.msra.mxu0 %v1800
    %1847 = vmatpush.bf16.msra.mxu0 %v1798
    %1848 = vmatpush.bf16.msra.mxu0 %v1796
    %1849 = vmatmul.bf16.gmra.mxu0 %v1746
    %v1850 = vpop.f32.mrf.mxu0
    %v1851 = vadd.f32 0.0, %v1850
    %v1852 = vpop.f32.mrf.mxu0
    %v1853 = vadd.f32 0.0, %v1852
    %1854 = vdwg.mxu0
    %v1855 = vadd.f32 %v1742, %v1837
    %v1856 = vadd.f32 %v1743, %v1851
    %v1857 = vadd.f32 %v1744, %v1839
    %v1858 = vadd.f32 %v1745, %v1853
    %v1859 = vld [vmem:[%s8] ss:$2 sm:$0x3]
    %v1861 = vperm.slane %v1859, 0
    %v1862 = vperm.slane %v1859, 1
    %v1865 = vadd.f32 %v1855, %v1861
    %v1866 = vadd.f32 %v1856, %v1862
    %v1867 = vadd.f32 %v1857, %v1861
    %v1868 = vadd.f32 %v1858, %v1862
    %v1869 = vmax.f32 %v1865, 0.0
    %v1870 = vmax.f32 %v1866, 0.0
    %v1871 = vmax.f32 %v1867, 0.0
    %v1872 = vmax.f32 %v1868, 0.0
    %v1889 = vunpack.c.l.b16 %v1508
    %v1890 = vunpack.c.h.b16 %v1508
    %v1891 = vunpack.c.l.b16 %v1509
    %v1892 = vunpack.c.h.b16 %v1509
    %v1893 = vunpack.c.l.b16 %v1510
    %v1894 = vunpack.c.h.b16 %v1510
    %v1895 = vunpack.c.l.b16 %v1511
    %v1896 = vunpack.c.h.b16 %v1511
    %v1897 = vunpack.c.l.b16 %v1512
    %v1898 = vunpack.c.h.b16 %v1512
    %v1899 = vunpack.c.l.b16 %v1513
    %v1900 = vunpack.c.h.b16 %v1513
    %v1901 = vunpack.c.l.b16 %v1514
    %v1902 = vunpack.c.h.b16 %v1514
    %v1903 = vunpack.c.l.b16 %v1515
    %v1904 = vunpack.c.h.b16 %v1515
    %v1905 = vunpack.c.l.b16 %v1516
    %v1906 = vunpack.c.h.b16 %v1516
    %v1907 = vunpack.c.l.b16 %v1517
    %v1908 = vunpack.c.h.b16 %v1517
    %v1909 = vunpack.c.l.b16 %v1518
    %v1910 = vunpack.c.h.b16 %v1518
    %v1911 = vunpack.c.l.b16 %v1519
    %v1912 = vunpack.c.h.b16 %v1519
    %v1913 = vunpack.c.l.b16 %v1520
    %v1914 = vunpack.c.h.b16 %v1520
    %v1915 = vunpack.c.l.b16 %v1521
    %v1916 = vunpack.c.h.b16 %v1521
    %v1917 = vunpack.c.l.b16 %v1522
    %v1918 = vunpack.c.h.b16 %v1522
    %v1919 = vunpack.c.l.b16 %v1523
    %v1920 = vunpack.c.h.b16 %v1523
    %v1921 = vpack.c.b16 %v1891, %v1889
    %v1922 = vpack.c.b16 %v1892, %v1890
    %v1923 = vpack.c.b16 %v1895, %v1893
    %v1924 = vpack.c.b16 %v1896, %v1894
    %v1925 = vpack.c.b16 %v1899, %v1897
    %v1926 = vpack.c.b16 %v1900, %v1898
    %v1927 = vpack.c.b16 %v1903, %v1901
    %v1928 = vpack.c.b16 %v1904, %v1902
    %v1929 = vpack.c.b16 %v1907, %v1905
    %v1930 = vpack.c.b16 %v1908, %v1906
    %v1931 = vpack.c.b16 %v1911, %v1909
    %v1932 = vpack.c.b16 %v1912, %v1910
    %v1933 = vpack.c.b16 %v1915, %v1913
    %v1934 = vpack.c.b16 %v1916, %v1914
    %v1935 = vpack.c.b16 %v1919, %v1917
    %v1936 = vpack.c.b16 %v1920, %v1918
    %1953 = vmatpush.bf16.msra.mxu0 %v1935
    %1954 = vmatpush.bf16.msra.mxu0 %v1933
    %1955 = vmatpush.bf16.msra.mxu0 %v1931
    %1956 = vmatpush.bf16.msra.mxu0 %v1929
    %1957 = vmatpush.bf16.msra.mxu0 %v1927
    %1958 = vmatpush.bf16.msra.mxu0 %v1925
    %1959 = vmatpush.bf16.msra.mxu0 %v1923
    %1960 = vmatpush.bf16.msra.mxu0 %v1921
    %1961 = vmatmul.bf16.gmra.mxu0 %v1633
    %v1962 = vpop.f32.mrf.mxu0
    %v1963 = vadd.f32 0.0, %v1962
    %v1964 = vpop.f32.mrf.mxu0
    %v1965 = vadd.f32 0.0, %v1964
    %1966 = vdwg.mxu0
    %1967 = vmatpush.bf16.msra.mxu0 %v1936
    %1968 = vmatpush.bf16.msra.mxu0 %v1934
    %1969 = vmatpush.bf16.msra.mxu0 %v1932
    %1970 = vmatpush.bf16.msra.mxu0 %v1930
    %1971 = vmatpush.bf16.msra.mxu0 %v1928
    %1972 = vmatpush.bf16.msra.mxu0 %v1926
    %1973 = vmatpush.bf16.msra.mxu0 %v1924
    %1974 = vmatpush.bf16.msra.mxu0 %v1922
    %1975 = vmatmul.bf16.gmra.mxu0 %v1633
    %v1976 = vpop.f32.mrf.mxu0
    %v1977 = vadd.f32 0.0, %v1976
    %v1978 = vpop.f32.mrf.mxu0
    %v1979 = vadd.f32 0.0, %v1978
    %1980 = vdwg.mxu0
    %v1981 = vpack.c.bf16 %v1869, 0.0
    %v1982 = vpack.c.bf16 %v1870, 0.0
    %v2015 = vunpack.c.l.b16 %v1412
    %v2016 = vunpack.c.h.b16 %v1412
    %v2017 = vunpack.c.l.b16 %v1413
    %v2018 = vunpack.c.h.b16 %v1413
    %v2019 = vunpack.c.l.b16 %v1414
    %v2020 = vunpack.c.h.b16 %v1414
    %v2021 = vunpack.c.l.b16 %v1415
    %v2022 = vunpack.c.h.b16 %v1415
    %v2023 = vunpack.c.l.b16 %v1416
    %v2024 = vunpack.c.h.b16 %v1416
    %v2025 = vunpack.c.l.b16 %v1417
    %v2026 = vunpack.c.h.b16 %v1417
    %v2027 = vunpack.c.l.b16 %v1418
    %v2028 = vunpack.c.h.b16 %v1418
    %v2029 = vunpack.c.l.b16 %v1419
    %v2030 = vunpack.c.h.b16 %v1419
    %v2031 = vunpack.c.l.b16 %v1420
    %v2032 = vunpack.c.h.b16 %v1420
    %v2033 = vunpack.c.l.b16 %v1421
    %v2034 = vunpack.c.h.b16 %v1421
    %v2035 = vunpack.c.l.b16 %v1422
    %v2036 = vunpack.c.h.b16 %v1422
    %v2037 = vunpack.c.l.b16 %v1423
    %v2038 = vunpack.c.h.b16 %v1423
    %v2039 = vunpack.c.l.b16 %v1424
    %v2040 = vunpack.c.h.b16 %v1424
    %v2041 = vunpack.c.l.b16 %v1425
    %v2042 = vunpack.c.h.b16 %v1425
    %v2043 = vunpack.c.l.b16 %v1426
    %v2044 = vunpack.c.h.b16 %v1426
    %v2045 = vunpack.c.l.b16 %v1427
    %v2046 = vunpack.c.h.b16 %v1427
    %v2047 = vunpack.c.l.b16 %v1428
    %v2048 = vunpack.c.h.b16 %v1428
    %v2049 = vunpack.c.l.b16 %v1429
    %v2050 = vunpack.c.h.b16 %v1429
    %v2051 = vunpack.c.l.b16 %v1430
    %v2052 = vunpack.c.h.b16 %v1430
    %v2053 = vunpack.c.l.b16 %v1431
    %v2054 = vunpack.c.h.b16 %v1431
    %v2055 = vunpack.c.l.b16 %v1432
    %v2056 = vunpack.c.h.b16 %v1432
    %v2057 = vunpack.c.l.b16 %v1433
    %v2058 = vunpack.c.h.b16 %v1433
    %v2059 = vunpack.c.l.b16 %v1434
    %v2060 = vunpack.c.h.b16 %v1434
    %v2061 = vunpack.c.l.b16 %v1435
    %v2062 = vunpack.c.h.b16 %v1435
    %v2063 = vunpack.c.l.b16 %v1436
    %v2064 = vunpack.c.h.b16 %v1436
    %v2065 = vunpack.c.l.b16 %v1437
    %v2066 = vunpack.c.h.b16 %v1437
    %v2067 = vunpack.c.l.b16 %v1438
    %v2068 = vunpack.c.h.b16 %v1438
    %v2069 = vunpack.c.l.b16 %v1439
    %v2070 = vunpack.c.h.b16 %v1439
    %v2071 = vunpack.c.l.b16 %v1440
    %v2072 = vunpack.c.h.b16 %v1440
    %v2073 = vunpack.c.l.b16 %v1441
    %v2074 = vunpack.c.h.b16 %v1441
    %v2075 = vunpack.c.l.b16 %v1442
    %v2076 = vunpack.c.h.b16 %v1442
    %v2077 = vunpack.c.l.b16 %v1443
    %v2078 = vunpack.c.h.b16 %v1443
    %v2079 = vpack.c.b16 %v2017, %v2015
    %v2080 = vpack.c.b16 %v2018, %v2016
    %v2081 = vpack.c.b16 %v2021, %v2019
    %v2082 = vpack.c.b16 %v2022, %v2020
    %v2083 = vpack.c.b16 %v2025, %v2023
    %v2084 = vpack.c.b16 %v2026, %v2024
    %v2085 = vpack.c.b16 %v2029, %v2027
    %v2086 = vpack.c.b16 %v2030, %v2028
    %v2087 = vpack.c.b16 %v2033, %v2031
    %v2088 = vpack.c.b16 %v2034, %v2032
    %v2089 = vpack.c.b16 %v2037, %v2035
    %v2090 = vpack.c.b16 %v2038, %v2036
    %v2091 = vpack.c.b16 %v2041, %v2039
    %v2092 = vpack.c.b16 %v2042, %v2040
    %v2093 = vpack.c.b16 %v2045, %v2043
    %v2094 = vpack.c.b16 %v2046, %v2044
    %v2095 = vpack.c.b16 %v2049, %v2047
    %v2096 = vpack.c.b16 %v2050, %v2048
    %v2097 = vpack.c.b16 %v2053, %v2051
    %v2098 = vpack.c.b16 %v2054, %v2052
    %v2099 = vpack.c.b16 %v2057, %v2055
    %v2100 = vpack.c.b16 %v2058, %v2056
    %v2101 = vpack.c.b16 %v2061, %v2059
    %v2102 = vpack.c.b16 %v2062, %v2060
    %v2103 = vpack.c.b16 %v2065, %v2063
    %v2104 = vpack.c.b16 %v2066, %v2064
    %v2105 = vpack.c.b16 %v2069, %v2067
    %v2106 = vpack.c.b16 %v2070, %v2068
    %v2107 = vpack.c.b16 %v2073, %v2071
    %v2108 = vpack.c.b16 %v2074, %v2072
    %v2109 = vpack.c.b16 %v2077, %v2075
    %v2110 = vpack.c.b16 %v2078, %v2076
    %2143 = vmatpush.bf16.msra.mxu0 %v2093
    %2144 = vmatpush.bf16.msra.mxu0 %v2091
    %2145 = vmatpush.bf16.msra.mxu0 %v2089
    %2146 = vmatpush.bf16.msra.mxu0 %v2087
    %2147 = vmatpush.bf16.msra.mxu0 %v2085
    %2148 = vmatpush.bf16.msra.mxu0 %v2083
    %2149 = vmatpush.bf16.msra.mxu0 %v2081
    %2150 = vmatpush.bf16.msra.mxu0 %v2079
    %2151 = vmatmul.bf16.gmra.mxu0 %v1981
    %v2152 = vpop.f32.mrf.mxu0
    %v2153 = vadd.f32 0.0, %v2152
    %v2154 = vpop.f32.mrf.mxu0
    %v2155 = vadd.f32 0.0, %v2154
    %2156 = vdwg.mxu0
    %2157 = vmatpush.bf16.msra.mxu0 %v2109
    %2158 = vmatpush.bf16.msra.mxu0 %v2107
    %2159 = vmatpush.bf16.msra.mxu0 %v2105
    %2160 = vmatpush.bf16.msra.mxu0 %v2103
    %2161 = vmatpush.bf16.msra.mxu0 %v2101
    %2162 = vmatpush.bf16.msra.mxu0 %v2099
    %2163 = vmatpush.bf16.msra.mxu0 %v2097
    %2164 = vmatpush.bf16.msra.mxu0 %v2095
    %2165 = vmatmul.bf16.gmra.mxu0 %v1982
    %v2166 = vpop.f32.mrf.mxu0
    %v2167 = vadd.f32 %v2153, %v2166
    %v2168 = vpop.f32.mrf.mxu0
    %v2169 = vadd.f32 %v2155, %v2168
    %2170 = vdwg.mxu0
    %2171 = vmatpush.bf16.msra.mxu0 %v2094
    %2172 = vmatpush.bf16.msra.mxu0 %v2092
    %2173 = vmatpush.bf16.msra.mxu0 %v2090
    %2174 = vmatpush.bf16.msra.mxu0 %v2088
    %2175 = vmatpush.bf16.msra.mxu0 %v2086
    %2176 = vmatpush.bf16.msra.mxu0 %v2084
    %2177 = vmatpush.bf16.msra.mxu0 %v2082
    %2178 = vmatpush.bf16.msra.mxu0 %v2080
    %2179 = vmatmul.bf16.gmra.mxu0 %v1981
    %v2180 = vpop.f32.mrf.mxu0
    %v2181 = vadd.f32 0.0, %v2180
    %v2182 = vpop.f32.mrf.mxu0
    %v2183 = vadd.f32 0.0, %v2182
    %2184 = vdwg.mxu0
    %2185 = vmatpush.bf16.msra.mxu0 %v2110
    %2186 = vmatpush.bf16.msra.mxu0 %v2108
    %2187 = vmatpush.bf16.msra.mxu0 %v2106
    %2188 = vmatpush.bf16.msra.mxu0 %v2104
    %2189 = vmatpush.bf16.msra.mxu0 %v2102
    %2190 = vmatpush.bf16.msra.mxu0 %v2100
    %2191 = vmatpush.bf16.msra.mxu0 %v2098
    %2192 = vmatpush.bf16.msra.mxu0 %v2096
    %2193 = vmatmul.bf16.gmra.mxu0 %v1982
    %v2194 = vpop.f32.mrf.mxu0
    %v2195 = vadd.f32 %v2181, %v2194
    %v2196 = vpop.f32.mrf.mxu0
    %v2197 = vadd.f32 %v2183, %v2196
    %2198 = vdwg.mxu0
    %v2199 = vpack.c.bf16 %v1871, %v1869
    %v2200 = vpack.c.bf16 %v1872, %v1870
    %v2233 = vunpack.c.l.b16 %v1444
    %v2234 = vunpack.c.h.b16 %v1444
    %v2235 = vunpack.c.l.b16 %v1445
    %v2236 = vunpack.c.h.b16 %v1445
    %v2237 = vunpack.c.l.b16 %v1446
    %v2238 = vunpack.c.h.b16 %v1446
    %v2239 = vunpack.c.l.b16 %v1447
    %v2240 = vunpack.c.h.b16 %v1447
    %v2241 = vunpack.c.l.b16 %v1448
    %v2242 = vunpack.c.h.b16 %v1448
    %v2243 = vunpack.c.l.b16 %v1449
    %v2244 = vunpack.c.h.b16 %v1449
    %v2245 = vunpack.c.l.b16 %v1450
    %v2246 = vunpack.c.h.b16 %v1450
    %v2247 = vunpack.c.l.b16 %v1451
    %v2248 = vunpack.c.h.b16 %v1451
    %v2249 = vunpack.c.l.b16 %v1452
    %v2250 = vunpack.c.h.b16 %v1452
    %v2251 = vunpack.c.l.b16 %v1453
    %v2252 = vunpack.c.h.b16 %v1453
    %v2253 = vunpack.c.l.b16 %v1454
    %v2254 = vunpack.c.h.b16 %v1454
    %v2255 = vunpack.c.l.b16 %v1455
    %v2256 = vunpack.c.h.b16 %v1455
    %v2257 = vunpack.c.l.b16 %v1456
    %v2258 = vunpack.c.h.b16 %v1456
    %v2259 = vunpack.c.l.b16 %v1457
    %v2260 = vunpack.c.h.b16 %v1457
    %v2261 = vunpack.c.l.b16 %v1458
    %v2262 = vunpack.c.h.b16 %v1458
    %v2263 = vunpack.c.l.b16 %v1459
    %v2264 = vunpack.c.h.b16 %v1459
    %v2265 = vunpack.c.l.b16 %v1460
    %v2266 = vunpack.c.h.b16 %v1460
    %v2267 = vunpack.c.l.b16 %v1461
    %v2268 = vunpack.c.h.b16 %v1461
    %v2269 = vunpack.c.l.b16 %v1462
    %v2270 = vunpack.c.h.b16 %v1462
    %v2271 = vunpack.c.l.b16 %v1463
    %v2272 = vunpack.c.h.b16 %v1463
    %v2273 = vunpack.c.l.b16 %v1464
    %v2274 = vunpack.c.h.b16 %v1464
    %v2275 = vunpack.c.l.b16 %v1465
    %v2276 = vunpack.c.h.b16 %v1465
    %v2277 = vunpack.c.l.b16 %v1466
    %v2278 = vunpack.c.h.b16 %v1466
    %v2279 = vunpack.c.l.b16 %v1467
    %v2280 = vunpack.c.h.b16 %v1467
    %v2281 = vunpack.c.l.b16 %v1468
    %v2282 = vunpack.c.h.b16 %v1468
    %v2283 = vunpack.c.l.b16 %v1469
    %v2284 = vunpack.c.h.b16 %v1469
    %v2285 = vunpack.c.l.b16 %v1470
    %v2286 = vunpack.c.h.b16 %v1470
    %v2287 = vunpack.c.l.b16 %v1471
    %v2288 = vunpack.c.h.b16 %v1471
    %v2289 = vunpack.c.l.b16 %v1472
    %v2290 = vunpack.c.h.b16 %v1472
    %v2291 = vunpack.c.l.b16 %v1473
    %v2292 = vunpack.c.h.b16 %v1473
    %v2293 = vunpack.c.l.b16 %v1474
    %v2294 = vunpack.c.h.b16 %v1474
    %v2295 = vunpack.c.l.b16 %v1475
    %v2296 = vunpack.c.h.b16 %v1475
    %v2297 = vpack.c.b16 %v2235, %v2233
    %v2298 = vpack.c.b16 %v2236, %v2234
    %v2299 = vpack.c.b16 %v2239, %v2237
    %v2300 = vpack.c.b16 %v2240, %v2238
    %v2301 = vpack.c.b16 %v2243, %v2241
    %v2302 = vpack.c.b16 %v2244, %v2242
    %v2303 = vpack.c.b16 %v2247, %v2245
    %v2304 = vpack.c.b16 %v2248, %v2246
    %v2305 = vpack.c.b16 %v2251, %v2249
    %v2306 = vpack.c.b16 %v2252, %v2250
    %v2307 = vpack.c.b16 %v2255, %v2253
    %v2308 = vpack.c.b16 %v2256, %v2254
    %v2309 = vpack.c.b16 %v2259, %v2257
    %v2310 = vpack.c.b16 %v2260, %v2258
    %v2311 = vpack.c.b16 %v2263, %v2261
    %v2312 = vpack.c.b16 %v2264, %v2262
    %v2313 = vpack.c.b16 %v2267, %v2265
    %v2314 = vpack.c.b16 %v2268, %v2266
    %v2315 = vpack.c.b16 %v2271, %v2269
    %v2316 = vpack.c.b16 %v2272, %v2270
    %v2317 = vpack.c.b16 %v2275, %v2273
    %v2318 = vpack.c.b16 %v2276, %v2274
    %v2319 = vpack.c.b16 %v2279, %v2277
    %v2320 = vpack.c.b16 %v2280, %v2278
    %v2321 = vpack.c.b16 %v2283, %v2281
    %v2322 = vpack.c.b16 %v2284, %v2282
    %v2323 = vpack.c.b16 %v2287, %v2285
    %v2324 = vpack.c.b16 %v2288, %v2286
    %v2325 = vpack.c.b16 %v2291, %v2289
    %v2326 = vpack.c.b16 %v2292, %v2290
    %v2327 = vpack.c.b16 %v2295, %v2293
    %v2328 = vpack.c.b16 %v2296, %v2294
    %2361 = vmatpush.bf16.msra.mxu0 %v2311
    %2362 = vmatpush.bf16.msra.mxu0 %v2309
    %2363 = vmatpush.bf16.msra.mxu0 %v2307
    %2364 = vmatpush.bf16.msra.mxu0 %v2305
    %2365 = vmatpush.bf16.msra.mxu0 %v2303
    %2366 = vmatpush.bf16.msra.mxu0 %v2301
    %2367 = vmatpush.bf16.msra.mxu0 %v2299
    %2368 = vmatpush.bf16.msra.mxu0 %v2297
    %2369 = vmatmul.bf16.gmra.mxu0 %v2199
    %v2370 = vpop.f32.mrf.mxu0
    %v2371 = vadd.f32 0.0, %v2370
    %v2372 = vpop.f32.mrf.mxu0
    %v2373 = vadd.f32 0.0, %v2372
    %2374 = vdwg.mxu0
    %2375 = vmatpush.bf16.msra.mxu0 %v2327
    %2376 = vmatpush.bf16.msra.mxu0 %v2325
    %2377 = vmatpush.bf16.msra.mxu0 %v2323
    %2378 = vmatpush.bf16.msra.mxu0 %v2321
    %2379 = vmatpush.bf16.msra.mxu0 %v2319
    %2380 = vmatpush.bf16.msra.mxu0 %v2317
    %2381 = vmatpush.bf16.msra.mxu0 %v2315
    %2382 = vmatpush.bf16.msra.mxu0 %v2313
    %2383 = vmatmul.bf16.gmra.mxu0 %v2200
    %v2384 = vpop.f32.mrf.mxu0
    %v2385 = vadd.f32 %v2371, %v2384
    %v2386 = vpop.f32.mrf.mxu0
    %v2387 = vadd.f32 %v2373, %v2386
    %2388 = vdwg.mxu0
    %2389 = vmatpush.bf16.msra.mxu0 %v2312
    %2390 = vmatpush.bf16.msra.mxu0 %v2310
    %2391 = vmatpush.bf16.msra.mxu0 %v2308
    %2392 = vmatpush.bf16.msra.mxu0 %v2306
    %2393 = vmatpush.bf16.msra.mxu0 %v2304
    %2394 = vmatpush.bf16.msra.mxu0 %v2302
    %2395 = vmatpush.bf16.msra.mxu0 %v2300
    %2396 = vmatpush.bf16.msra.mxu0 %v2298
    %2397 = vmatmul.bf16.gmra.mxu0 %v2199
    %v2398 = vpop.f32.mrf.mxu0
    %v2399 = vadd.f32 0.0, %v2398
    %v2400 = vpop.f32.mrf.mxu0
    %v2401 = vadd.f32 0.0, %v2400
    %2402 = vdwg.mxu0
    %2403 = vmatpush.bf16.msra.mxu0 %v2328
    %2404 = vmatpush.bf16.msra.mxu0 %v2326
    %2405 = vmatpush.bf16.msra.mxu0 %v2324
    %2406 = vmatpush.bf16.msra.mxu0 %v2322
    %2407 = vmatpush.bf16.msra.mxu0 %v2320
    %2408 = vmatpush.bf16.msra.mxu0 %v2318
    %2409 = vmatpush.bf16.msra.mxu0 %v2316
    %2410 = vmatpush.bf16.msra.mxu0 %v2314
    %2411 = vmatmul.bf16.gmra.mxu0 %v2200
    %v2412 = vpop.f32.mrf.mxu0
    %v2413 = vadd.f32 %v2399, %v2412
    %v2414 = vpop.f32.mrf.mxu0
    %v2415 = vadd.f32 %v2401, %v2414
    %2416 = vdwg.mxu0
    %v2417 = vadd.f32 %v2167, %v2385
    %v2418 = vadd.f32 %v2195, %v2413
    %v2419 = vadd.f32 %v2169, %v2387
    %v2420 = vadd.f32 %v2197, %v2415
    %v2421 = vpack.c.bf16 0.0, %v1871
    %v2422 = vpack.c.bf16 0.0, %v1872
    %v2455 = vunpack.c.l.b16 %v1476
    %v2456 = vunpack.c.h.b16 %v1476
    %v2457 = vunpack.c.l.b16 %v1477
    %v2458 = vunpack.c.h.b16 %v1477
    %v2459 = vunpack.c.l.b16 %v1478
    %v2460 = vunpack.c.h.b16 %v1478
    %v2461 = vunpack.c.l.b16 %v1479
    %v2462 = vunpack.c.h.b16 %v1479
    %v2463 = vunpack.c.l.b16 %v1480
    %v2464 = vunpack.c.h.b16 %v1480
    %v2465 = vunpack.c.l.b16 %v1481
    %v2466 = vunpack.c.h.b16 %v1481
    %v2467 = vunpack.c.l.b16 %v1482
    %v2468 = vunpack.c.h.b16 %v1482
    %v2469 = vunpack.c.l.b16 %v1483
    %v2470 = vunpack.c.h.b16 %v1483
    %v2471 = vunpack.c.l.b16 %v1484
    %v2472 = vunpack.c.h.b16 %v1484
    %v2473 = vunpack.c.l.b16 %v1485
    %v2474 = vunpack.c.h.b16 %v1485
    %v2475 = vunpack.c.l.b16 %v1486
    %v2476 = vunpack.c.h.b16 %v1486
    %v2477 = vunpack.c.l.b16 %v1487
    %v2478 = vunpack.c.h.b16 %v1487
    %v2479 = vunpack.c.l.b16 %v1488
    %v2480 = vunpack.c.h.b16 %v1488
    %v2481 = vunpack.c.l.b16 %v1489
    %v2482 = vunpack.c.h.b16 %v1489
    %v2483 = vunpack.c.l.b16 %v1490
    %v2484 = vunpack.c.h.b16 %v1490
    %v2485 = vunpack.c.l.b16 %v1491
    %v2486 = vunpack.c.h.b16 %v1491
    %v2487 = vunpack.c.l.b16 %v1492
    %v2488 = vunpack.c.h.b16 %v1492
    %v2489 = vunpack.c.l.b16 %v1493
    %v2490 = vunpack.c.h.b16 %v1493
    %v2491 = vunpack.c.l.b16 %v1494
    %v2492 = vunpack.c.h.b16 %v1494
    %v2493 = vunpack.c.l.b16 %v1495
    %v2494 = vunpack.c.h.b16 %v1495
    %v2495 = vunpack.c.l.b16 %v1496
    %v2496 = vunpack.c.h.b16 %v1496
    %v2497 = vunpack.c.l.b16 %v1497
    %v2498 = vunpack.c.h.b16 %v1497
    %v2499 = vunpack.c.l.b16 %v1498
    %v2500 = vunpack.c.h.b16 %v1498
    %v2501 = vunpack.c.l.b16 %v1499
    %v2502 = vunpack.c.h.b16 %v1499
    %v2503 = vunpack.c.l.b16 %v1500
    %v2504 = vunpack.c.h.b16 %v1500
    %v2505 = vunpack.c.l.b16 %v1501
    %v2506 = vunpack.c.h.b16 %v1501
    %v2507 = vunpack.c.l.b16 %v1502
    %v2508 = vunpack.c.h.b16 %v1502
    %v2509 = vunpack.c.l.b16 %v1503
    %v2510 = vunpack.c.h.b16 %v1503
    %v2511 = vunpack.c.l.b16 %v1504
    %v2512 = vunpack.c.h.b16 %v1504
    %v2513 = vunpack.c.l.b16 %v1505
    %v2514 = vunpack.c.h.b16 %v1505
    %v2515 = vunpack.c.l.b16 %v1506
    %v2516 = vunpack.c.h.b16 %v1506
    %v2517 = vunpack.c.l.b16 %v1507
    %v2518 = vunpack.c.h.b16 %v1507
    %v2519 = vpack.c.b16 %v2457, %v2455
    %v2520 = vpack.c.b16 %v2458, %v2456
    %v2521 = vpack.c.b16 %v2461, %v2459
    %v2522 = vpack.c.b16 %v2462, %v2460
    %v2523 = vpack.c.b16 %v2465, %v2463
    %v2524 = vpack.c.b16 %v2466, %v2464
    %v2525 = vpack.c.b16 %v2469, %v2467
    %v2526 = vpack.c.b16 %v2470, %v2468
    %v2527 = vpack.c.b16 %v2473, %v2471
    %v2528 = vpack.c.b16 %v2474, %v2472
    %v2529 = vpack.c.b16 %v2477, %v2475
    %v2530 = vpack.c.b16 %v2478, %v2476
    %v2531 = vpack.c.b16 %v2481, %v2479
    %v2532 = vpack.c.b16 %v2482, %v2480
    %v2533 = vpack.c.b16 %v2485, %v2483
    %v2534 = vpack.c.b16 %v2486, %v2484
    %v2535 = vpack.c.b16 %v2489, %v2487
    %v2536 = vpack.c.b16 %v2490, %v2488
    %v2537 = vpack.c.b16 %v2493, %v2491
    %v2538 = vpack.c.b16 %v2494, %v2492
    %v2539 = vpack.c.b16 %v2497, %v2495
    %v2540 = vpack.c.b16 %v2498, %v2496
    %v2541 = vpack.c.b16 %v2501, %v2499
    %v2542 = vpack.c.b16 %v2502, %v2500
    %v2543 = vpack.c.b16 %v2505, %v2503
    %v2544 = vpack.c.b16 %v2506, %v2504
    %v2545 = vpack.c.b16 %v2509, %v2507
    %v2546 = vpack.c.b16 %v2510, %v2508
    %v2547 = vpack.c.b16 %v2513, %v2511
    %v2548 = vpack.c.b16 %v2514, %v2512
    %v2549 = vpack.c.b16 %v2517, %v2515
    %v2550 = vpack.c.b16 %v2518, %v2516
    %2583 = vmatpush.bf16.msra.mxu0 %v2533
    %2584 = vmatpush.bf16.msra.mxu0 %v2531
    %2585 = vmatpush.bf16.msra.mxu0 %v2529
    %2586 = vmatpush.bf16.msra.mxu0 %v2527
    %2587 = vmatpush.bf16.msra.mxu0 %v2525
    %2588 = vmatpush.bf16.msra.mxu0 %v2523
    %2589 = vmatpush.bf16.msra.mxu0 %v2521
    %2590 = vmatpush.bf16.msra.mxu0 %v2519
    %2591 = vmatmul.bf16.gmra.mxu0 %v2421
    %v2592 = vpop.f32.mrf.mxu0
    %v2593 = vadd.f32 0.0, %v2592
    %v2594 = vpop.f32.mrf.mxu0
    %v2595 = vadd.f32 0.0, %v2594
    %2596 = vdwg.mxu0
    %2597 = vmatpush.bf16.msra.mxu0 %v2549
    %2598 = vmatpush.bf16.msra.mxu0 %v2547
    %2599 = vmatpush.bf16.msra.mxu0 %v2545
    %2600 = vmatpush.bf16.msra.mxu0 %v2543
    %2601 = vmatpush.bf16.msra.mxu0 %v2541
    %2602 = vmatpush.bf16.msra.mxu0 %v2539
    %2603 = vmatpush.bf16.msra.mxu0 %v2537
    %2604 = vmatpush.bf16.msra.mxu0 %v2535
    %2605 = vmatmul.bf16.gmra.mxu0 %v2422
    %v2606 = vpop.f32.mrf.mxu0
    %v2607 = vadd.f32 %v2593, %v2606
    %v2608 = vpop.f32.mrf.mxu0
    %v2609 = vadd.f32 %v2595, %v2608
    %2610 = vdwg.mxu0
    %2611 = vmatpush.bf16.msra.mxu0 %v2534
    %2612 = vmatpush.bf16.msra.mxu0 %v2532
    %2613 = vmatpush.bf16.msra.mxu0 %v2530
    %2614 = vmatpush.bf16.msra.mxu0 %v2528
    %2615 = vmatpush.bf16.msra.mxu0 %v2526
    %2616 = vmatpush.bf16.msra.mxu0 %v2524
    %2617 = vmatpush.bf16.msra.mxu0 %v2522
    %2618 = vmatpush.bf16.msra.mxu0 %v2520
    %2619 = vmatmul.bf16.gmra.mxu0 %v2421
    %v2620 = vpop.f32.mrf.mxu0
    %v2621 = vadd.f32 0.0, %v2620
    %v2622 = vpop.f32.mrf.mxu0
    %v2623 = vadd.f32 0.0, %v2622
    %2624 = vdwg.mxu0
    %2625 = vmatpush.bf16.msra.mxu0 %v2550
    %2626 = vmatpush.bf16.msra.mxu0 %v2548
    %2627 = vmatpush.bf16.msra.mxu0 %v2546
    %2628 = vmatpush.bf16.msra.mxu0 %v2544
    %2629 = vmatpush.bf16.msra.mxu0 %v2542
    %2630 = vmatpush.bf16.msra.mxu0 %v2540
    %2631 = vmatpush.bf16.msra.mxu0 %v2538
    %2632 = vmatpush.bf16.msra.mxu0 %v2536
    %2633 = vmatmul.bf16.gmra.mxu0 %v2422
    %v2634 = vpop.f32.mrf.mxu0
    %v2635 = vadd.f32 %v2621, %v2634
    %v2636 = vpop.f32.mrf.mxu0
    %v2637 = vadd.f32 %v2623, %v2636
    %2638 = vdwg.mxu0
    %v2639 = vadd.f32 %v2417, %v2607
    %v2640 = vadd.f32 %v2418, %v2635
    %v2641 = vadd.f32 %v2419, %v2609
    %v2642 = vadd.f32 %v2420, %v2637
    %s2643 = scalar_lea.vmem %s8, 1
    %v2644 = vld [vmem:[%s2643] ss:$2 sm:$0x3]
    %v2645 = vadd.f32 %v2639, %v1963
    %v2646 = vadd.f32 %v2640, %v1977
    %v2647 = vadd.f32 %v2641, %v1965
    %v2648 = vadd.f32 %v2642, %v1979
    %v2650 = vperm.slane %v2644, 0
    %v2651 = vperm.slane %v2644, 1
    %v2654 = vadd.f32 %v2645, %v2650
    %v2655 = vadd.f32 %v2646, %v2651
    %v2656 = vadd.f32 %v2647, %v2650
    %v2657 = vadd.f32 %v2648, %v2651
    %v2658 = vmax.f32 %v2654, 0.0
    %v2659 = vmax.f32 %v2655, 0.0
    %v2660 = vmax.f32 %v2656, 0.0
    %v2661 = vmax.f32 %v2657, 0.0
    %v2662 = vadd.f32 %v2658, %v2660
    %v2663 = vadd.f32 %v2659, %v2661
    %v2664 = vmul.f32 %v2662, 0.5
    %v2665 = vmul.f32 %v2663, 0.5
    %v2666 = vpack.c.bf16 %v2664, %v2664
    %v2667 = vpack.c.bf16 %v2665, %v2665
    %v2668 = vld [vmem:[%s9] sm:$0xf]
    %v2669 = vld [vmem:[%s9 + $0x4] sm:$0xf]
    %v2670 = vld [vmem:[%s9 + $0x8] sm:$0xf]
    %v2671 = vld [vmem:[%s9 + $0xc] sm:$0xf]
    %v2672 = vld [vmem:[%s9 + $0x10] sm:$0xf]
    %v2673 = vld [vmem:[%s9 + $0x14] sm:$0xf]
    %v2674 = vld [vmem:[%s9 + $0x18] sm:$0xf]
    %v2675 = vld [vmem:[%s9 + $0x1c] sm:$0xf]
    %v2676 = vld [vmem:[%s9 + $0x20] sm:$0xf]
    %v2677 = vld [vmem:[%s9 + $0x24] sm:$0xf]
    %v2678 = vld [vmem:[%s9 + $0x28] sm:$0xf]
    %v2679 = vld [vmem:[%s9 + $0x2c] sm:$0xf]
    %v2680 = vld [vmem:[%s9 + $0x30] sm:$0xf]
    %v2681 = vld [vmem:[%s9 + $0x34] sm:$0xf]
    %v2682 = vld [vmem:[%s9 + $0x38] sm:$0xf]
    %v2683 = vld [vmem:[%s9 + $0x3c] sm:$0xf]
    %v2684 = vld [vmem:[%s9 + $0x40] sm:$0xf]
    %v2685 = vld [vmem:[%s9 + $0x44] sm:$0xf]
    %v2686 = vld [vmem:[%s9 + $0x48] sm:$0xf]
    %v2687 = vld [vmem:[%s9 + $0x4c] sm:$0xf]
    %v2688 = vld [vmem:[%s9 + $0x50] sm:$0xf]
    %v2689 = vld [vmem:[%s9 + $0x54] sm:$0xf]
    %v2690 = vld [vmem:[%s9 + $0x58] sm:$0xf]
    %v2691 = vld [vmem:[%s9 + $0x5c] sm:$0xf]
    %v2692 = vld [vmem:[%s9 + $0x60] sm:$0xf]
    %v2693 = vld [vmem:[%s9 + $0x64] sm:$0xf]
    %v2694 = vld [vmem:[%s9 + $0x68] sm:$0xf]
    %v2695 = vld [vmem:[%s9 + $0x6c] sm:$0xf]
    %v2696 = vld [vmem:[%s9 + $0x70] sm:$0xf]
    %v2697 = vld [vmem:[%s9 + $0x74] sm:$0xf]
    %v2698 = vld [vmem:[%s9 + $0x78] sm:$0xf]
    %v2699 = vld [vmem:[%s9 + $0x7c] sm:$0xf]
    %v2700 = vld [vmem:[%s10] sm:$0x1]
    %v2702 = vperm.slane %v2700, 0
    %v2736 = vunpack.c.l.b16 %v2668
    %v2737 = vunpack.c.l.b16 %v2669
    %v2738 = vunpack.c.l.b16 %v2670
    %v2739 = vunpack.c.l.b16 %v2671
    %v2740 = vunpack.c.l.b16 %v2672
    %v2741 = vunpack.c.l.b16 %v2673
    %v2742 = vunpack.c.l.b16 %v2674
    %v2743 = vunpack.c.l.b16 %v2675
    %v2744 = vunpack.c.l.b16 %v2676
    %v2745 = vunpack.c.l.b16 %v2677
    %v2746 = vunpack.c.l.b16 %v2678
    %v2747 = vunpack.c.l.b16 %v2679
    %v2748 = vunpack.c.l.b16 %v2680
    %v2749 = vunpack.c.l.b16 %v2681
    %v2750 = vunpack.c.l.b16 %v2682
    %v2751 = vunpack.c.l.b16 %v2683
    %v2752 = vunpack.c.l.b16 %v2684
    %v2753 = vunpack.c.l.b16 %v2685
    %v2754 = vunpack.c.l.b16 %v2686
    %v2755 = vunpack.c.l.b16 %v2687
    %v2756 = vunpack.c.l.b16 %v2688
    %v2757 = vunpack.c.l.b16 %v2689
    %v2758 = vunpack.c.l.b16 %v2690
    %v2759 = vunpack.c.l.b16 %v2691
    %v2760 = vunpack.c.l.b16 %v2692
    %v2761 = vunpack.c.l.b16 %v2693
    %v2762 = vunpack.c.l.b16 %v2694
    %v2763 = vunpack.c.l.b16 %v2695
    %v2764 = vunpack.c.l.b16 %v2696
    %v2765 = vunpack.c.l.b16 %v2697
    %v2766 = vunpack.c.l.b16 %v2698
    %v2767 = vunpack.c.l.b16 %v2699
    %v2768 = vpack.c.b16 %v2737, %v2736
    %v2769 = vpack.c.b16 %v2739, %v2738
    %v2770 = vpack.c.b16 %v2741, %v2740
    %v2771 = vpack.c.b16 %v2743, %v2742
    %v2772 = vpack.c.b16 %v2745, %v2744
    %v2773 = vpack.c.b16 %v2747, %v2746
    %v2774 = vpack.c.b16 %v2749, %v2748
    %v2775 = vpack.c.b16 %v2751, %v2750
    %v2776 = vpack.c.b16 %v2753, %v2752
    %v2777 = vpack.c.b16 %v2755, %v2754
    %v2778 = vpack.c.b16 %v2757, %v2756
    %v2779 = vpack.c.b16 %v2759, %v2758
    %v2780 = vpack.c.b16 %v2761, %v2760
    %v2781 = vpack.c.b16 %v2763, %v2762
    %v2782 = vpack.c.b16 %v2765, %v2764
    %v2783 = vpack.c.b16 %v2767, %v2766
    %2800 = vmatpush.bf16.msra.mxu0 %v2775
    %2801 = vmatpush.bf16.msra.mxu0 %v2774
    %2802 = vmatpush.bf16.msra.mxu0 %v2773
    %2803 = vmatpush.bf16.msra.mxu0 %v2772
    %2804 = vmatpush.bf16.msra.mxu0 %v2771
    %2805 = vmatpush.bf16.msra.mxu0 %v2770
    %2806 = vmatpush.bf16.msra.mxu0 %v2769
    %2807 = vmatpush.bf16.msra.mxu0 %v2768
    %2808 = vmatmul.bf16.gmra.mxu0 %v2666
    %v2809 = vpop.f32.mrf.mxu0
    %v2810 = vadd.f32 %v2702, %v2809
    %v2811 = vpop.f32.mrf.mxu0
    %2812 = vdwg.mxu0
    %2813 = vmatpush.bf16.msra.mxu0 %v2783
    %2814 = vmatpush.bf16.msra.mxu0 %v2782
    %2815 = vmatpush.bf16.msra.mxu0 %v2781
    %2816 = vmatpush.bf16.msra.mxu0 %v2780
    %2817 = vmatpush.bf16.msra.mxu0 %v2779
    %2818 = vmatpush.bf16.msra.mxu0 %v2778
    %2819 = vmatpush.bf16.msra.mxu0 %v2777
    %2820 = vmatpush.bf16.msra.mxu0 %v2776
    %2821 = vmatmul.bf16.gmra.mxu0 %v2667
    %v2822 = vpop.f32.mrf.mxu0
    %v2823 = vadd.f32 %v2810, %v2822
    %v2824 = vpop.f32.mrf.mxu0
    %2825 = vdwg.mxu0
    %vm2826 = vcmask 15360
    %2827 = vst.msk [vmem:[%s11] sm:$0xff] %vm2826, %v2823
    // Predicated region
    $region54: #{resnet1d_forward.1} parent=1 // pred_check
      _
    $region55: #{resnet1d_forward.1} parent=1 // pred_check_branch
      %2829 = sbr.rel (0) target = $region57
    $region56: #{resnet1d_forward.1} parent=1 // pred_region
      _
    $region57: #{resnet1d_forward.1} parent=1 // pred_fallthru
      _
    // Predicated region
    $region58: #{resnet1d_forward.1} parent=1 // pred_check
      _
    $region59: #{resnet1d_forward.1} parent=1 // pred_check_branch
      %2831 = sbr.rel (0) target = $region61
    $region60: #{resnet1d_forward.1} parent=1 // pred_region
      _
    $region61: #{resnet1d_forward.1} parent=1 // pred_fallthru
      _
    %2832 = vsyncpa [#allocation3], 1
    %2833 = vsyncpa [#allocation5], 1

</llo_original>
